<compile_context>
chip_gen: v5e
topology: v5e:2x2
jax: 0.10.0
libtpu: 0.0.40
codegen_flags: <defaults>
</compile_context>

<pallas_src>
import jax
import jax.numpy as jnp
from jax import lax
from jax.experimental import pallas as pl
from jax.experimental.pallas import tpu as pltpu


# ----------------------------- Pallas kernel ------------------------------- #

def _make_wavefront_lstm_fc_kernel(num_layers, T, B, H):
    """Kernel factory: `num_layers` wavefront-scheduled LSTM layers + Linear.

    Ref layout (all VMEM resident, no grid):
      x_ref          : (T*B, D_in) bf16, time-major rows (row = t*B + b)
      per layer l    : w_ih (D_l, 4H) bf16, w_hh (H, 4H) bf16, b (1, 4H) f32
      w_fc           : (H, O) bf16
      b_fc           : (1, O) f32
      out_ref        : (B, O) f32
      scratch        : gx (T*B, 4H) f32 (hoisted layer-0 input projection)
    """
    L = num_layers
    n_wave = T + L - 1
    # Full unroll only for short recurrences; cap for longer ones (review: full
    # unroll at large T explodes live ranges against the 64-vreg file).
    unroll = True if n_wave <= 16 else 8

    def kernel(*refs):
        x_ref = refs[0]
        layer_refs = refs[1:1 + 3 * L]
        w_fc_ref = refs[1 + 3 * L]
        b_fc_ref = refs[2 + 3 * L]
        out_ref = refs[3 + 3 * L]
        gx_sc = refs[4 + 3 * L]

        # Hoist the (small) weights once; they stay vreg/VMEM resident.
        w_ih = [layer_refs[3 * l][...] for l in range(L)]       # (D_l, 4H) bf16
        w_hh = [layer_refs[3 * l + 1][...] for l in range(L)]   # (H, 4H)   bf16
        bias = [layer_refs[3 * l + 2][...] for l in range(L)]   # (1, 4H)   f32

        # Layer-0 input projection hoisted out of the recurrence: one MXU
        # matmul with M = T*B rows, bias folded in once (off the serial path).
        # TODO(synk): for large T*B, chunk this over T into a double-buffered
        # bf16 scratch so it respects v7x's 64 MiB VMEM.
        gx_sc[...] = (
            jnp.dot(x_ref[...], w_ih[0], preferred_element_type=jnp.float32)
            + bias[0])

        def lstm_cell(gates_x, h_prev, c_prev, w_hh_l):
            # The only matmul on the serial recurrent chain: (B,H)@(H,4H).
            gates = gates_x + jnp.dot(h_prev.astype(w_hh_l.dtype), w_hh_l,
                                      preferred_element_type=jnp.float32)
            # Lane-dense activations: ONE full-width sigmoid pass gives i/f/o,
            # one tanh pass gives g (plus tanh(c_new) below): 3 EUP passes.
            sig = jax.nn.sigmoid(gates)
            g_g = jnp.tanh(gates[:, 2 * H:3 * H])
            i_g = sig[:, 0 * H:1 * H]
            f_g = sig[:, 1 * H:2 * H]
            o_g = sig[:, 3 * H:4 * H]
            c_new = f_g * c_prev + i_g * g_g
            h_new = o_g * jnp.tanh(c_new)
            return h_new, c_new

        def wave_step(w, carry):
            # Wavefront (diagonal) schedule: at wavefront index w, layer l
            # processes timestep t = w - l.  Layer l's input h_{l-1}(t) was
            # produced at wavefront step w-1, so all L layer-steps inside one
            # wavefront step are mutually independent and can overlap on the
            # MXU/EUP/VPU.  Boundary steps (t outside [0,T)) are masked out
            # with jnp.where on the carried state.
            hs, cs = carry
            new_hs, new_cs = [], []
            for l in range(L):
                t = w - l
                if l == 0:
                    t_idx = jnp.clip(t, 0, T - 1)
                    row = pl.multiple_of(t_idx * B, B)
                    gates_x = gx_sc[pl.ds(row, B), :]
                else:
                    # Per-step input projection from the previous layer's
                    # hidden state (carried in vregs, never via VMEM).
                    x_in = hs[l - 1].astype(w_ih[l].dtype)
                    gates_x = (jnp.dot(x_in, w_ih[l],
                                       preferred_element_type=jnp.float32)
                               + bias[l])
                h_new, c_new = lstm_cell(gates_x, hs[l], cs[l], w_hh[l])
                valid = jnp.logical_and(t >= 0, t < T)
                new_hs.append(jnp.where(valid, h_new, hs[l]))
                new_cs.append(jnp.where(valid, c_new, cs[l]))
            return tuple(new_hs), tuple(new_cs)

        # h0 = c0 = 0, matching torch.zeros(...) in the PyTorch forward.
        zeros = jnp.zeros((B, H), jnp.float32)
        init = (tuple(zeros for _ in range(L)), tuple(zeros for _ in range(L)))
        hs_f, _ = lax.fori_loop(0, n_wave, wave_step, init, unroll=unroll)

        # Fused FC head on the last layer's final hidden state: (B,H)@(H,O)+b.
        w_fc = w_fc_ref[...]
        out_ref[...] = (
            jnp.dot(hs_f[L - 1].astype(w_fc.dtype), w_fc,
                    preferred_element_type=jnp.float32) + b_fc_ref[...])

    return kernel


# ------------------------------ JAX wrapper --------------------------------- #

_VMEM = pl.BlockSpec(memory_space=pltpu.MemorySpace.VMEM)


@jax.jit
def lstm_model_forward(x, params):
    """x: (B, T, input_size) batch-first, like PyTorch. Returns (B, output_size) f32."""
    B, T, D_in = x.shape
    H = params["lstm"][0][1].shape[1]          # w_hh: (4H, H)
    w_fc, b_fc = params["fc"]
    O = w_fc.shape[0]
    L = len(params["lstm"])

    # Time-major, flattened to 2-D (row = t*B + b); bf16 operands for the MXU.
    # TODO(synk): once a T-chunked grid exists, fold this transpose into the
    # input BlockSpec index_map instead of a separate XLA op.
    x_2d = jnp.transpose(x, (1, 0, 2)).reshape(T * B, D_in).astype(jnp.bfloat16)

    inputs = [x_2d]
    for (w_ih, w_hh, b_ih, b_hh) in params["lstm"]:
        inputs.append(jnp.transpose(w_ih).astype(jnp.bfloat16))     # (D_l, 4H)
        inputs.append(jnp.transpose(w_hh).astype(jnp.bfloat16))     # (H, 4H)
        inputs.append((b_ih + b_hh).astype(jnp.float32)[None, :])   # (1, 4H)
    inputs.append(jnp.transpose(w_fc).astype(jnp.bfloat16))         # (H, O)
    inputs.append(b_fc.astype(jnp.float32)[None, :])                # (1, O)

    # Only scratch left: hoisted layer-0 input-projection gates.
    scratch_shapes = [pltpu.VMEM((T * B, 4 * H), jnp.float32)]

    # Explicit scoped-VMEM budget sized to the actual footprint (default is
    # 16/32 MiB depending on generation); capped at 64 MiB so it stays within
    # v7x's physical VMEM.
    buf_bytes = (int(x_2d.size) * 2                       # input, bf16
                 + T * B * 4 * H * 4                      # gx scratch, f32
                 + B * O * 4                              # output, f32
                 + sum(int(a.size) * a.dtype.itemsize for a in inputs[1:]))
    vmem_limit = min(64 * 1024 * 1024,
                     max(32 * 1024 * 1024, 2 * buf_bytes + (2 << 20)))

    kernel = _make_wavefront_lstm_fc_kernel(L, T, B, H)

    # Single fused kernel: no grid, everything VMEM-resident at these sizes.
    # TODO(synk): for large batch on v7x (2 TensorCores), add a batch-parallel
    # grid axis (dimension_semantics=("parallel",)) with a b-major layout so
    # both cores are used; no effect on v5e/v6e (1 TC).
    return pl.pallas_call(
        kernel,
        out_shape=jax.ShapeDtypeStruct((B, O), jnp.float32),
        in_specs=[_VMEM] * len(inputs),
        out_specs=_VMEM,
        scratch_shapes=scratch_shapes,
        compiler_params=pltpu.CompilerParams(vmem_limit_bytes=vmem_limit),
    )(*inputs)


# --------------------------- parameter construction ------------------------- #

def init_params(key, input_size, hidden_size, num_layers, output_size):
    """Deterministic init matching PyTorch shapes (uniform(-k, k), k=1/sqrt(H))."""
    k = 1.0 / jnp.sqrt(jnp.float32(hidden_size))
    lstm_params = []
    for layer in range(num_layers):
        d_in = input_size if layer == 0 else hidden_size
        key, k1, k2, k3, k4 = jax.random.split(key, 5)
        w_ih = jax.random.uniform(k1, (4 * hidden_size, d_in), jnp.float32, -k, k)
        w_hh = jax.random.uniform(k2, (4 * hidden_size, hidden_size), jnp.float32, -k, k)
        b_ih = jax.random.uniform(k3, (4 * hidden_size,), jnp.float32, -k, k)
        b_hh = jax.random.uniform(k4, (4 * hidden_size,), jnp.float32, -k, k)
        lstm_params.append((w_ih, w_hh, b_ih, b_hh))
    key, k5, k6 = jax.random.split(key, 3)
    kf = 1.0 / jnp.sqrt(jnp.float32(hidden_size))
    w_fc = jax.random.uniform(k5, (output_size, hidden_size), jnp.float32, -kf, kf)
    b_fc = jax.random.uniform(k6, (output_size,), jnp.float32, -kf, kf)
    return {"lstm": lstm_params, "fc": (w_fc, b_fc)}


# ------------------------------ pure-JAX references -------------------------- #

def reference_forward(x, params):
    """Full-precision (f32) reference with PyTorch LSTM semantics."""
    h_seq = jnp.transpose(x, (1, 0, 2)).astype(jnp.float32)  # (T, B, D)
    for (w_ih, w_hh, b_ih, b_hh) in params["lstm"]:
        T, B, _ = h_seq.shape
        H = w_hh.shape[1]
        h = jnp.zeros((B, H), jnp.float32)
        c = jnp.zeros((B, H), jnp.float32)
        outs = []
        for t in range(T):
            gates = h_seq[t] @ w_ih.T + h @ w_hh.T + b_ih + b_hh
            i = jax.nn.sigmoid(gates[:, 0 * H:1 * H])
            f = jax.nn.sigmoid(gates[:, 1 * H:2 * H])
            g = jnp.tanh(gates[:, 2 * H:3 * H])
            o = jax.nn.sigmoid(gates[:, 3 * H:4 * H])
            c = f * c + i * g
            h = o * jnp.tanh(c)
            outs.append(h)
        h_seq = jnp.stack(outs, axis=0)
    w_fc, b_fc = params["fc"]
    return h_seq[-1] @ w_fc.T + b_fc


def reference_forward_bf16ops(x, params):
    """bf16-matmul-operand reference mirroring the kernel's numerics
    (f32 accumulation and f32 h/c state) -- for a tighter self-check."""
    h_seq = jnp.transpose(x, (1, 0, 2)).astype(jnp.bfloat16)  # (T, B, D)
    h = None
    for (w_ih, w_hh, b_ih, b_hh) in params["lstm"]:
        T, B, _ = h_seq.shape
        H = w_hh.shape[1]
        w_ih_t = jnp.transpose(w_ih).astype(jnp.bfloat16)
        w_hh_t = jnp.transpose(w_hh).astype(jnp.bfloat16)
        b = (b_ih + b_hh).astype(jnp.float32)
        h = jnp.zeros((B, H), jnp.float32)
        c = jnp.zeros((B, H), jnp.float32)
        outs = []
        for t in range(T):
            gates = (jnp.dot(h_seq[t], w_ih_t, preferred_element_type=jnp.float32)
                     + jnp.dot(h.astype(jnp.bfloat16), w_hh_t,
                               preferred_element_type=jnp.float32)
                     + b)
            i = jax.nn.sigmoid(gates[:, 0 * H:1 * H])
            f = jax.nn.sigmoid(gates[:, 1 * H:2 * H])
            g = jnp.tanh(gates[:, 2 * H:3 * H])
            o = jax.nn.sigmoid(gates[:, 3 * H:4 * H])
            c = f * c + i * g
            h = o * jnp.tanh(c)
            outs.append(h.astype(jnp.bfloat16))
        h_seq = jnp.stack(outs, axis=0)
    w_fc, b_fc = params["fc"]
    return (jnp.dot(h.astype(jnp.bfloat16),
                    jnp.transpose(w_fc).astype(jnp.bfloat16),
                    preferred_element_type=jnp.float32)
            + b_fc.astype(jnp.float32))


# ------------------------------------ main ----------------------------------- #

if __name__ == "__main__":
    BATCH, SEQ, INPUT_SIZE, HIDDEN_SIZE, NUM_LAYERS, OUTPUT_SIZE = 8, 8, 16, 32, 2, 8

    key = jax.random.PRNGKey(0)
    key, xkey = jax.random.split(key)
    x = jax.random.normal(xkey, (BATCH, SEQ, INPUT_SIZE), dtype=jnp.float32)

    params = init_params(key, INPUT_SIZE, HIDDEN_SIZE, NUM_LAYERS, OUTPUT_SIZE)

    out = jax.block_until_ready(lstm_model_forward(x, params))
    ref32 = reference_forward(x, params)
    ref_bf16 = reference_forward_bf16ops(x, params)

    assert out.shape == (BATCH, OUTPUT_SIZE), out.shape
    # bf16 MXU operands with f32 accumulation/state -> bf16-level tolerance
    # vs the f32 reference ...
    assert jnp.allclose(out, ref32, atol=4e-2, rtol=4e-2), (
        f"max abs err vs f32 ref {jnp.max(jnp.abs(out - ref32))}")
    # ... and a much tighter check vs a reference with matched bf16 numerics
    # (guards against gate-ordering / bias bugs that 4e-2 could mask).
    assert jnp.allclose(out, ref_bf16, atol=1e-2, rtol=1e-2), (
        f"max abs err vs bf16-matched ref {jnp.max(jnp.abs(out - ref_bf16))}")

    print("KERNEL_OK")
</pallas_src>

<mosaic_0001>
module attributes {stable_mosaic.version = 11 : i64} {
  func.func @kernel(%arg0: memref<64x16xbf16, #tpu.memory_space<vmem>>, %arg1: memref<16x128xbf16, #tpu.memory_space<vmem>>, %arg2: memref<32x128xbf16, #tpu.memory_space<vmem>>, %arg3: memref<1x128xf32, #tpu.memory_space<vmem>>, %arg4: memref<32x128xbf16, #tpu.memory_space<vmem>>, %arg5: memref<32x128xbf16, #tpu.memory_space<vmem>>, %arg6: memref<1x128xf32, #tpu.memory_space<vmem>>, %arg7: memref<32x8xbf16, #tpu.memory_space<vmem>>, %arg8: memref<1x8xf32, #tpu.memory_space<vmem>>, %arg9: memref<8x8xf32, #tpu.memory_space<vmem>>, %arg10: memref<64x128xf32, #tpu.memory_space<vmem>>) attributes {dimension_semantics = [], scalar_prefetch = 0 : i64, scratch_operands = 1 : i64, tpu.core_type = #tpu.core_type<tc>} {
    %c0 = arith.constant 0 : index
    %c0_0 = arith.constant 0 : index
    %0 = vector.load %arg1[%c0, %c0_0] : memref<16x128xbf16, #tpu.memory_space<vmem>>, vector<16x128xbf16>
    %c0_1 = arith.constant 0 : index
    %c0_2 = arith.constant 0 : index
    %1 = vector.load %arg4[%c0_1, %c0_2] : memref<32x128xbf16, #tpu.memory_space<vmem>>, vector<32x128xbf16>
    %c0_3 = arith.constant 0 : index
    %c0_4 = arith.constant 0 : index
    %2 = vector.load %arg2[%c0_3, %c0_4] : memref<32x128xbf16, #tpu.memory_space<vmem>>, vector<32x128xbf16>
    %c0_5 = arith.constant 0 : index
    %c0_6 = arith.constant 0 : index
    %3 = vector.load %arg5[%c0_5, %c0_6] : memref<32x128xbf16, #tpu.memory_space<vmem>>, vector<32x128xbf16>
    %c0_7 = arith.constant 0 : index
    %c0_8 = arith.constant 0 : index
    %4 = vector.load %arg3[%c0_7, %c0_8] : memref<1x128xf32, #tpu.memory_space<vmem>>, vector<1x128xf32>
    %c0_9 = arith.constant 0 : index
    %c0_10 = arith.constant 0 : index
    %5 = vector.load %arg6[%c0_9, %c0_10] : memref<1x128xf32, #tpu.memory_space<vmem>>, vector<1x128xf32>
    %c0_11 = arith.constant 0 : index
    %c0_12 = arith.constant 0 : index
    %6 = vector.load %arg0[%c0_11, %c0_12] : memref<64x16xbf16, #tpu.memory_space<vmem>>, vector<64x16xbf16>
    %cst = arith.constant dense<0.000000e+00> : vector<64x128xf32>
    %7 = tpu.matmul %6, %0, %cst {dimension_numbers = #tpu.dot_dimension_numbers<[1], [0], [0], [1], [0, 0, 1, 1], [], []>} : vector<64x16xbf16>, vector<16x128xbf16>, vector<64x128xf32> -> vector<64x128xf32>
    %8 = vector.broadcast %4 : vector<1x128xf32> to vector<64x128xf32>
    %9 = arith.addf %7, %8 : vector<64x128xf32>
    %c0_13 = arith.constant 0 : index
    %c0_14 = arith.constant 0 : index
    %10 = vector.load %arg10[%c0_13, %c0_14] : memref<64x128xf32, #tpu.memory_space<vmem>>, vector<64x128xf32>
    tpu.vector_store %arg10[%c0_13, %c0_14], %9 {strides = array<i32>} : memref<64x128xf32, #tpu.memory_space<vmem>>, vector<64x128xf32>,
    %cst_15 = arith.constant 0.000000e+00 : f32
    %11 = vector.broadcast %cst_15 : f32 to vector<8x32xf32>
    %c0_i32 = arith.constant 0 : i32
    %c0_i32_16 = arith.constant 0 : i32
    %12 = arith.subi %c0_i32, %c0_i32_16 : i32
    %c0_i32_17 = arith.constant 0 : i32
    %c7_i32 = arith.constant 7 : i32
    %13 = arith.maxsi %c0_i32_17, %12 : i32
    %14 = arith.minsi %c7_i32, %13 : i32
    %c8_i32 = arith.constant 8 : i32
    %15 = arith.muli %14, %c8_i32 : i32
    %16 = tpu.assume_multiple %15, 8 : i32
    %17 = arith.index_cast %16 : i32 to index
    %c0_18 = arith.constant 0 : index
    %18 = vector.load %arg10[%17, %c0_18] : memref<64x128xf32, #tpu.memory_space<vmem>>, vector<8x128xf32>
    %19 = arith.truncf %11 : vector<8x32xf32> to vector<8x32xbf16>
    %cst_19 = arith.constant dense<0.000000e+00> : vector<8x128xf32>
    %20 = tpu.matmul %19, %2, %cst_19 {dimension_numbers = #tpu.dot_dimension_numbers<[1], [0], [0], [1], [0, 0, 1, 1], [], []>} : vector<8x32xbf16>, vector<32x128xbf16>, vector<8x128xf32> -> vector<8x128xf32>
    %21 = arith.addf %18, %20 : vector<8x128xf32>
    %22 = arith.negf %21 : vector<8x128xf32>
    %23 = math.exp %22 : vector<8x128xf32>
    %cst_20 = arith.constant 1.000000e+00 : f32
    %24 = vector.broadcast %cst_20 : f32 to vector<8x128xf32>
    %25 = arith.addf %24, %23 : vector<8x128xf32>
    %26 = arith.divf %24, %25 : vector<8x128xf32>
    %27 = vector.extract_strided_slice %21 {offsets = [0, 64], sizes = [8, 32], strides = [1, 1]} : vector<8x128xf32> to vector<8x32xf32>
    %28 = math.tanh %27 : vector<8x32xf32>
    %29 = vector.extract_strided_slice %26 {offsets = [0, 0], sizes = [8, 32], strides = [1, 1]} : vector<8x128xf32> to vector<8x32xf32>
    %30 = vector.extract_strided_slice %26 {offsets = [0, 32], sizes = [8, 32], strides = [1, 1]} : vector<8x128xf32> to vector<8x32xf32>
    %31 = vector.extract_strided_slice %26 {offsets = [0, 96], sizes = [8, 32], strides = [1, 1]} : vector<8x128xf32> to vector<8x32xf32>
    %32 = arith.mulf %30, %11 : vector<8x32xf32>
    %33 = arith.mulf %29, %28 : vector<8x32xf32>
    %34 = arith.addf %32, %33 : vector<8x32xf32>
    %35 = math.tanh %34 : vector<8x32xf32>
    %36 = arith.mulf %31, %35 : vector<8x32xf32>
    %c0_i32_21 = arith.constant 0 : i32
    %37 = arith.cmpi sge, %12, %c0_i32_21 : i32
    %c8_i32_22 = arith.constant 8 : i32
    %38 = arith.cmpi slt, %12, %c8_i32_22 : i32
    %39 = arith.andi %37, %38 : i1
    %40 = arith.select %39, %36, %11 : vector<8x32xf32>
    %41 = arith.select %39, %34, %11 : vector<8x32xf32>
    %c1_i32 = arith.constant 1 : i32
    %42 = arith.subi %c0_i32, %c1_i32 : i32
    %43 = arith.truncf %11 : vector<8x32xf32> to vector<8x32xbf16>
    %cst_23 = arith.constant dense<0.000000e+00> : vector<8x128xf32>
    %44 = tpu.matmul %43, %1, %cst_23 {dimension_numbers = #tpu.dot_dimension_numbers<[1], [0], [0], [1], [0, 0, 1, 1], [], []>} : vector<8x32xbf16>, vector<32x128xbf16>, vector<8x128xf32> -> vector<8x128xf32>
    %45 = vector.broadcast %5 : vector<1x128xf32> to vector<8x128xf32>
    %46 = arith.addf %44, %45 : vector<8x128xf32>
    %47 = arith.truncf %11 : vector<8x32xf32> to vector<8x32xbf16>
    %cst_24 = arith.constant dense<0.000000e+00> : vector<8x128xf32>
    %48 = tpu.matmul %47, %3, %cst_24 {dimension_numbers = #tpu.dot_dimension_numbers<[1], [0], [0], [1], [0, 0, 1, 1], [], []>} : vector<8x32xbf16>, vector<32x128xbf16>, vector<8x128xf32> -> vector<8x128xf32>
    %49 = arith.addf %46, %48 : vector<8x128xf32>
    %50 = arith.negf %49 : vector<8x128xf32>
    %51 = math.exp %50 : vector<8x128xf32>
    %cst_25 = arith.constant 1.000000e+00 : f32
    %52 = vector.broadcast %cst_25 : f32 to vector<8x128xf32>
    %53 = arith.addf %52, %51 : vector<8x128xf32>
    %54 = arith.divf %52, %53 : vector<8x128xf32>
    %55 = vector.extract_strided_slice %49 {offsets = [0, 64], sizes = [8, 32], strides = [1, 1]} : vector<8x128xf32> to vector<8x32xf32>
    %56 = math.tanh %55 : vector<8x32xf32>
    %57 = vector.extract_strided_slice %54 {offsets = [0, 0], sizes = [8, 32], strides = [1, 1]} : vector<8x128xf32> to vector<8x32xf32>
    %58 = vector.extract_strided_slice %54 {offsets = [0, 32], sizes = [8, 32], strides = [1, 1]} : vector<8x128xf32> to vector<8x32xf32>
    %59 = vector.extract_strided_slice %54 {offsets = [0, 96], sizes = [8, 32], strides = [1, 1]} : vector<8x128xf32> to vector<8x32xf32>
    %60 = arith.mulf %58, %11 : vector<8x32xf32>
    %61 = arith.mulf %57, %56 : vector<8x32xf32>
    %62 = arith.addf %60, %61 : vector<8x32xf32>
    %63 = math.tanh %62 : vector<8x32xf32>
    %64 = arith.mulf %59, %63 : vector<8x32xf32>
    %c0_i32_26 = arith.constant 0 : i32
    %65 = arith.cmpi sge, %42, %c0_i32_26 : i32
    %c8_i32_27 = arith.constant 8 : i32
    %66 = arith.cmpi slt, %42, %c8_i32_27 : i32
    %67 = arith.andi %65, %66 : i1
    %68 = arith.select %67, %64, %11 : vector<8x32xf32>
    %69 = arith.select %67, %62, %11 : vector<8x32xf32>
    %c1_i32_28 = arith.constant 1 : i32
    %c0_i32_29 = arith.constant 0 : i32
    %70 = arith.subi %c1_i32_28, %c0_i32_29 : i32
    %c0_i32_30 = arith.constant 0 : i32
    %c7_i32_31 = arith.constant 7 : i32
    %71 = arith.maxsi %c0_i32_30, %70 : i32
    %72 = arith.minsi %c7_i32_31, %71 : i32
    %c8_i32_32 = arith.constant 8 : i32
    %73 = arith.muli %72, %c8_i32_32 : i32
    %74 = tpu.assume_multiple %73, 8 : i32
    %75 = arith.index_cast %74 : i32 to index
    %c0_33 = arith.constant 0 : index
    %76 = vector.load %arg10[%75, %c0_33] : memref<64x128xf32, #tpu.memory_space<vmem>>, vector<8x128xf32>
    %77 = arith.truncf %40 : vector<8x32xf32> to vector<8x32xbf16>
    %cst_34 = arith.constant dense<0.000000e+00> : vector<8x128xf32>
    %78 = tpu.matmul %77, %2, %cst_34 {dimension_numbers = #tpu.dot_dimension_numbers<[1], [0], [0], [1], [0, 0, 1, 1], [], []>} : vector<8x32xbf16>, vector<32x128xbf16>, vector<8x128xf32> -> vector<8x128xf32>
    %79 = arith.addf %76, %78 : vector<8x128xf32>
    %80 = arith.negf %79 : vector<8x128xf32>
    %81 = math.exp %80 : vector<8x128xf32>
    %cst_35 = arith.constant 1.000000e+00 : f32
    %82 = vector.broadcast %cst_35 : f32 to vector<8x128xf32>
    %83 = arith.addf %82, %81 : vector<8x128xf32>
    %84 = arith.divf %82, %83 : vector<8x128xf32>
    %85 = vector.extract_strided_slice %79 {offsets = [0, 64], sizes = [8, 32], strides = [1, 1]} : vector<8x128xf32> to vector<8x32xf32>
    %86 = math.tanh %85 : vector<8x32xf32>
    %87 = vector.extract_strided_slice %84 {offsets = [0, 0], sizes = [8, 32], strides = [1, 1]} : vector<8x128xf32> to vector<8x32xf32>
    %88 = vector.extract_strided_slice %84 {offsets = [0, 32], sizes = [8, 32], strides = [1, 1]} : vector<8x128xf32> to vector<8x32xf32>
    %89 = vector.extract_strided_slice %84 {offsets = [0, 96], sizes = [8, 32], strides = [1, 1]} : vector<8x128xf32> to vector<8x32xf32>
    %90 = arith.mulf %88, %41 : vector<8x32xf32>
    %91 = arith.mulf %87, %86 : vector<8x32xf32>
    %92 = arith.addf %90, %91 : vector<8x32xf32>
    %93 = math.tanh %92 : vector<8x32xf32>
    %94 = arith.mulf %89, %93 : vector<8x32xf32>
    %c0_i32_36 = arith.constant 0 : i32
    %95 = arith.cmpi sge, %70, %c0_i32_36 : i32
    %c8_i32_37 = arith.constant 8 : i32
    %96 = arith.cmpi slt, %70, %c8_i32_37 : i32
    %97 = arith.andi %95, %96 : i1
    %98 = arith.select %97, %94, %40 : vector<8x32xf32>
    %99 = arith.select %97, %92, %41 : vector<8x32xf32>
    %c1_i32_38 = arith.constant 1 : i32
    %100 = arith.subi %c1_i32_28, %c1_i32_38 : i32
    %101 = arith.truncf %40 : vector<8x32xf32> to vector<8x32xbf16>
    %cst_39 = arith.constant dense<0.000000e+00> : vector<8x128xf32>
    %102 = tpu.matmul %101, %1, %cst_39 {dimension_numbers = #tpu.dot_dimension_numbers<[1], [0], [0], [1], [0, 0, 1, 1], [], []>} : vector<8x32xbf16>, vector<32x128xbf16>, vector<8x128xf32> -> vector<8x128xf32>
    %103 = vector.broadcast %5 : vector<1x128xf32> to vector<8x128xf32>
    %104 = arith.addf %102, %103 : vector<8x128xf32>
    %105 = arith.truncf %68 : vector<8x32xf32> to vector<8x32xbf16>
    %cst_40 = arith.constant dense<0.000000e+00> : vector<8x128xf32>
    %106 = tpu.matmul %105, %3, %cst_40 {dimension_numbers = #tpu.dot_dimension_numbers<[1], [0], [0], [1], [0, 0, 1, 1], [], []>} : vector<8x32xbf16>, vector<32x128xbf16>, vector<8x128xf32> -> vector<8x128xf32>
    %107 = arith.addf %104, %106 : vector<8x128xf32>
    %108 = arith.negf %107 : vector<8x128xf32>
    %109 = math.exp %108 : vector<8x128xf32>
    %cst_41 = arith.constant 1.000000e+00 : f32
    %110 = vector.broadcast %cst_41 : f32 to vector<8x128xf32>
    %111 = arith.addf %110, %109 : vector<8x128xf32>
    %112 = arith.divf %110, %111 : vector<8x128xf32>
    %113 = vector.extract_strided_slice %107 {offsets = [0, 64], sizes = [8, 32], strides = [1, 1]} : vector<8x128xf32> to vector<8x32xf32>
    %114 = math.tanh %113 : vector<8x32xf32>
    %115 = vector.extract_strided_slice %112 {offsets = [0, 0], sizes = [8, 32], strides = [1, 1]} : vector<8x128xf32> to vector<8x32xf32>
    %116 = vector.extract_strided_slice %112 {offsets = [0, 32], sizes = [8, 32], strides = [1, 1]} : vector<8x128xf32> to vector<8x32xf32>
    %117 = vector.extract_strided_slice %112 {offsets = [0, 96], sizes = [8, 32], strides = [1, 1]} : vector<8x128xf32> to vector<8x32xf32>
    %118 = arith.mulf %116, %69 : vector<8x32xf32>
    %119 = arith.mulf %115, %114 : vector<8x32xf32>
    %120 = arith.addf %118, %119 : vector<8x32xf32>
    %121 = math.tanh %120 : vector<8x32xf32>
    %122 = arith.mulf %117, %121 : vector<8x32xf32>
    %c0_i32_42 = arith.constant 0 : i32
    %123 = arith.cmpi sge, %100, %c0_i32_42 : i32
    %c8_i32_43 = arith.constant 8 : i32
    %124 = arith.cmpi slt, %100, %c8_i32_43 : i32
    %125 = arith.andi %123, %124 : i1
    %126 = arith.select %125, %122, %68 : vector<8x32xf32>
    %127 = arith.select %125, %120, %69 : vector<8x32xf32>
    %c2_i32 = arith.constant 2 : i32
    %c0_i32_44 = arith.constant 0 : i32
    %128 = arith.subi %c2_i32, %c0_i32_44 : i32
    %c0_i32_45 = arith.constant 0 : i32
    %c7_i32_46 = arith.constant 7 : i32
    %129 = arith.maxsi %c0_i32_45, %128 : i32
    %130 = arith.minsi %c7_i32_46, %129 : i32
    %c8_i32_47 = arith.constant 8 : i32
    %131 = arith.muli %130, %c8_i32_47 : i32
    %132 = tpu.assume_multiple %131, 8 : i32
    %133 = arith.index_cast %132 : i32 to index
    %c0_48 = arith.constant 0 : index
    %134 = vector.load %arg10[%133, %c0_48] : memref<64x128xf32, #tpu.memory_space<vmem>>, vector<8x128xf32>
    %135 = arith.truncf %98 : vector<8x32xf32> to vector<8x32xbf16>
    %cst_49 = arith.constant dense<0.000000e+00> : vector<8x128xf32>
    %136 = tpu.matmul %135, %2, %cst_49 {dimension_numbers = #tpu.dot_dimension_numbers<[1], [0], [0], [1], [0, 0, 1, 1], [], []>} : vector<8x32xbf16>, vector<32x128xbf16>, vector<8x128xf32> -> vector<8x128xf32>
    %137 = arith.addf %134, %136 : vector<8x128xf32>
    %138 = arith.negf %137 : vector<8x128xf32>
    %139 = math.exp %138 : vector<8x128xf32>
    %cst_50 = arith.constant 1.000000e+00 : f32
    %140 = vector.broadcast %cst_50 : f32 to vector<8x128xf32>
    %141 = arith.addf %140, %139 : vector<8x128xf32>
    %142 = arith.divf %140, %141 : vector<8x128xf32>
    %143 = vector.extract_strided_slice %137 {offsets = [0, 64], sizes = [8, 32], strides = [1, 1]} : vector<8x128xf32> to vector<8x32xf32>
    %144 = math.tanh %143 : vector<8x32xf32>
    %145 = vector.extract_strided_slice %142 {offsets = [0, 0], sizes = [8, 32], strides = [1, 1]} : vector<8x128xf32> to vector<8x32xf32>
    %146 = vector.extract_strided_slice %142 {offsets = [0, 32], sizes = [8, 32], strides = [1, 1]} : vector<8x128xf32> to vector<8x32xf32>
    %147 = vector.extract_strided_slice %142 {offsets = [0, 96], sizes = [8, 32], strides = [1, 1]} : vector<8x128xf32> to vector<8x32xf32>
    %148 = arith.mulf %146, %99 : vector<8x32xf32>
    %149 = arith.mulf %145, %144 : vector<8x32xf32>
    %150 = arith.addf %148, %149 : vector<8x32xf32>
    %151 = math.tanh %150 : vector<8x32xf32>
    %152 = arith.mulf %147, %151 : vector<8x32xf32>
    %c0_i32_51 = arith.constant 0 : i32
    %153 = arith.cmpi sge, %128, %c0_i32_51 : i32
    %c8_i32_52 = arith.constant 8 : i32
    %154 = arith.cmpi slt, %128, %c8_i32_52 : i32
    %155 = arith.andi %153, %154 : i1
    %156 = arith.select %155, %152, %98 : vector<8x32xf32>
    %157 = arith.select %155, %150, %99 : vector<8x32xf32>
    %c1_i32_53 = arith.constant 1 : i32
    %158 = arith.subi %c2_i32, %c1_i32_53 : i32
    %159 = arith.truncf %98 : vector<8x32xf32> to vector<8x32xbf16>
    %cst_54 = arith.constant dense<0.000000e+00> : vector<8x128xf32>
    %160 = tpu.matmul %159, %1, %cst_54 {dimension_numbers = #tpu.dot_dimension_numbers<[1], [0], [0], [1], [0, 0, 1, 1], [], []>} : vector<8x32xbf16>, vector<32x128xbf16>, vector<8x128xf32> -> vector<8x128xf32>
    %161 = vector.broadcast %5 : vector<1x128xf32> to vector<8x128xf32>
    %162 = arith.addf %160, %161 : vector<8x128xf32>
    %163 = arith.truncf %126 : vector<8x32xf32> to vector<8x32xbf16>
    %cst_55 = arith.constant dense<0.000000e+00> : vector<8x128xf32>
    %164 = tpu.matmul %163, %3, %cst_55 {dimension_numbers = #tpu.dot_dimension_numbers<[1], [0], [0], [1], [0, 0, 1, 1], [], []>} : vector<8x32xbf16>, vector<32x128xbf16>, vector<8x128xf32> -> vector<8x128xf32>
    %165 = arith.addf %162, %164 : vector<8x128xf32>
    %166 = arith.negf %165 : vector<8x128xf32>
    %167 = math.exp %166 : vector<8x128xf32>
    %cst_56 = arith.constant 1.000000e+00 : f32
    %168 = vector.broadcast %cst_56 : f32 to vector<8x128xf32>
    %169 = arith.addf %168, %167 : vector<8x128xf32>
    %170 = arith.divf %168, %169 : vector<8x128xf32>
    %171 = vector.extract_strided_slice %165 {offsets = [0, 64], sizes = [8, 32], strides = [1, 1]} : vector<8x128xf32> to vector<8x32xf32>
    %172 = math.tanh %171 : vector<8x32xf32>
    %173 = vector.extract_strided_slice %170 {offsets = [0, 0], sizes = [8, 32], strides = [1, 1]} : vector<8x128xf32> to vector<8x32xf32>
    %174 = vector.extract_strided_slice %170 {offsets = [0, 32], sizes = [8, 32], strides = [1, 1]} : vector<8x128xf32> to vector<8x32xf32>
    %175 = vector.extract_strided_slice %170 {offsets = [0, 96], sizes = [8, 32], strides = [1, 1]} : vector<8x128xf32> to vector<8x32xf32>
    %176 = arith.mulf %174, %127 : vector<8x32xf32>
    %177 = arith.mulf %173, %172 : vector<8x32xf32>
    %178 = arith.addf %176, %177 : vector<8x32xf32>
    %179 = math.tanh %178 : vector<8x32xf32>
    %180 = arith.mulf %175, %179 : vector<8x32xf32>
    %c0_i32_57 = arith.constant 0 : i32
    %181 = arith.cmpi sge, %158, %c0_i32_57 : i32
    %c8_i32_58 = arith.constant 8 : i32
    %182 = arith.cmpi slt, %158, %c8_i32_58 : i32
    %183 = arith.andi %181, %182 : i1
    %184 = arith.select %183, %180, %126 : vector<8x32xf32>
    %185 = arith.select %183, %178, %127 : vector<8x32xf32>
    %c3_i32 = arith.constant 3 : i32
    %c0_i32_59 = arith.constant 0 : i32
    %186 = arith.subi %c3_i32, %c0_i32_59 : i32
    %c0_i32_60 = arith.constant 0 : i32
    %c7_i32_61 = arith.constant 7 : i32
    %187 = arith.maxsi %c0_i32_60, %186 : i32
    %188 = arith.minsi %c7_i32_61, %187 : i32
    %c8_i32_62 = arith.constant 8 : i32
    %189 = arith.muli %188, %c8_i32_62 : i32
    %190 = tpu.assume_multiple %189, 8 : i32
    %191 = arith.index_cast %190 : i32 to index
    %c0_63 = arith.constant 0 : index
    %192 = vector.load %arg10[%191, %c0_63] : memref<64x128xf32, #tpu.memory_space<vmem>>, vector<8x128xf32>
    %193 = arith.truncf %156 : vector<8x32xf32> to vector<8x32xbf16>
    %cst_64 = arith.constant dense<0.000000e+00> : vector<8x128xf32>
    %194 = tpu.matmul %193, %2, %cst_64 {dimension_numbers = #tpu.dot_dimension_numbers<[1], [0], [0], [1], [0, 0, 1, 1], [], []>} : vector<8x32xbf16>, vector<32x128xbf16>, vector<8x128xf32> -> vector<8x128xf32>
    %195 = arith.addf %192, %194 : vector<8x128xf32>
    %196 = arith.negf %195 : vector<8x128xf32>
    %197 = math.exp %196 : vector<8x128xf32>
    %cst_65 = arith.constant 1.000000e+00 : f32
    %198 = vector.broadcast %cst_65 : f32 to vector<8x128xf32>
    %199 = arith.addf %198, %197 : vector<8x128xf32>
    %200 = arith.divf %198, %199 : vector<8x128xf32>
    %201 = vector.extract_strided_slice %195 {offsets = [0, 64], sizes = [8, 32], strides = [1, 1]} : vector<8x128xf32> to vector<8x32xf32>
    %202 = math.tanh %201 : vector<8x32xf32>
    %203 = vector.extract_strided_slice %200 {offsets = [0, 0], sizes = [8, 32], strides = [1, 1]} : vector<8x128xf32> to vector<8x32xf32>
    %204 = vector.extract_strided_slice %200 {offsets = [0, 32], sizes = [8, 32], strides = [1, 1]} : vector<8x128xf32> to vector<8x32xf32>
    %205 = vector.extract_strided_slice %200 {offsets = [0, 96], sizes = [8, 32], strides = [1, 1]} : vector<8x128xf32> to vector<8x32xf32>
    %206 = arith.mulf %204, %157 : vector<8x32xf32>
    %207 = arith.mulf %203, %202 : vector<8x32xf32>
    %208 = arith.addf %206, %207 : vector<8x32xf32>
    %209 = math.tanh %208 : vector<8x32xf32>
    %210 = arith.mulf %205, %209 : vector<8x32xf32>
    %c0_i32_66 = arith.constant 0 : i32
    %211 = arith.cmpi sge, %186, %c0_i32_66 : i32
    %c8_i32_67 = arith.constant 8 : i32
    %212 = arith.cmpi slt, %186, %c8_i32_67 : i32
    %213 = arith.andi %211, %212 : i1
    %214 = arith.select %213, %210, %156 : vector<8x32xf32>
    %215 = arith.select %213, %208, %157 : vector<8x32xf32>
    %c1_i32_68 = arith.constant 1 : i32
    %216 = arith.subi %c3_i32, %c1_i32_68 : i32
    %217 = arith.truncf %156 : vector<8x32xf32> to vector<8x32xbf16>
    %cst_69 = arith.constant dense<0.000000e+00> : vector<8x128xf32>
    %218 = tpu.matmul %217, %1, %cst_69 {dimension_numbers = #tpu.dot_dimension_numbers<[1], [0], [0], [1], [0, 0, 1, 1], [], []>} : vector<8x32xbf16>, vector<32x128xbf16>, vector<8x128xf32> -> vector<8x128xf32>
    %219 = vector.broadcast %5 : vector<1x128xf32> to vector<8x128xf32>
    %220 = arith.addf %218, %219 : vector<8x128xf32>
    %221 = arith.truncf %184 : vector<8x32xf32> to vector<8x32xbf16>
    %cst_70 = arith.constant dense<0.000000e+00> : vector<8x128xf32>
    %222 = tpu.matmul %221, %3, %cst_70 {dimension_numbers = #tpu.dot_dimension_numbers<[1], [0], [0], [1], [0, 0, 1, 1], [], []>} : vector<8x32xbf16>, vector<32x128xbf16>, vector<8x128xf32> -> vector<8x128xf32>
    %223 = arith.addf %220, %222 : vector<8x128xf32>
    %224 = arith.negf %223 : vector<8x128xf32>
    %225 = math.exp %224 : vector<8x128xf32>
    %cst_71 = arith.constant 1.000000e+00 : f32
    %226 = vector.broadcast %cst_71 : f32 to vector<8x128xf32>
    %227 = arith.addf %226, %225 : vector<8x128xf32>
    %228 = arith.divf %226, %227 : vector<8x128xf32>
    %229 = vector.extract_strided_slice %223 {offsets = [0, 64], sizes = [8, 32], strides = [1, 1]} : vector<8x128xf32> to vector<8x32xf32>
    %230 = math.tanh %229 : vector<8x32xf32>
    %231 = vector.extract_strided_slice %228 {offsets = [0, 0], sizes = [8, 32], strides = [1, 1]} : vector<8x128xf32> to vector<8x32xf32>
    %232 = vector.extract_strided_slice %228 {offsets = [0, 32], sizes = [8, 32], strides = [1, 1]} : vector<8x128xf32> to vector<8x32xf32>
    %233 = vector.extract_strided_slice %228 {offsets = [0, 96], sizes = [8, 32], strides = [1, 1]} : vector<8x128xf32> to vector<8x32xf32>
    %234 = arith.mulf %232, %185 : vector<8x32xf32>
    %235 = arith.mulf %231, %230 : vector<8x32xf32>
    %236 = arith.addf %234, %235 : vector<8x32xf32>
    %237 = math.tanh %236 : vector<8x32xf32>
    %238 = arith.mulf %233, %237 : vector<8x32xf32>
    %c0_i32_72 = arith.constant 0 : i32
    %239 = arith.cmpi sge, %216, %c0_i32_72 : i32
    %c8_i32_73 = arith.constant 8 : i32
    %240 = arith.cmpi slt, %216, %c8_i32_73 : i32
    %241 = arith.andi %239, %240 : i1
    %242 = arith.select %241, %238, %184 : vector<8x32xf32>
    %243 = arith.select %241, %236, %185 : vector<8x32xf32>
    %c4_i32 = arith.constant 4 : i32
    %c0_i32_74 = arith.constant 0 : i32
    %244 = arith.subi %c4_i32, %c0_i32_74 : i32
    %c0_i32_75 = arith.constant 0 : i32
    %c7_i32_76 = arith.constant 7 : i32
    %245 = arith.maxsi %c0_i32_75, %244 : i32
    %246 = arith.minsi %c7_i32_76, %245 : i32
    %c8_i32_77 = arith.constant 8 : i32
    %247 = arith.muli %246, %c8_i32_77 : i32
    %248 = tpu.assume_multiple %247, 8 : i32
    %249 = arith.index_cast %248 : i32 to index
    %c0_78 = arith.constant 0 : index
    %250 = vector.load %arg10[%249, %c0_78] : memref<64x128xf32, #tpu.memory_space<vmem>>, vector<8x128xf32>
    %251 = arith.truncf %214 : vector<8x32xf32> to vector<8x32xbf16>
    %cst_79 = arith.constant dense<0.000000e+00> : vector<8x128xf32>
    %252 = tpu.matmul %251, %2, %cst_79 {dimension_numbers = #tpu.dot_dimension_numbers<[1], [0], [0], [1], [0, 0, 1, 1], [], []>} : vector<8x32xbf16>, vector<32x128xbf16>, vector<8x128xf32> -> vector<8x128xf32>
    %253 = arith.addf %250, %252 : vector<8x128xf32>
    %254 = arith.negf %253 : vector<8x128xf32>
    %255 = math.exp %254 : vector<8x128xf32>
    %cst_80 = arith.constant 1.000000e+00 : f32
    %256 = vector.broadcast %cst_80 : f32 to vector<8x128xf32>
    %257 = arith.addf %256, %255 : vector<8x128xf32>
    %258 = arith.divf %256, %257 : vector<8x128xf32>
    %259 = vector.extract_strided_slice %253 {offsets = [0, 64], sizes = [8, 32], strides = [1, 1]} : vector<8x128xf32> to vector<8x32xf32>
    %260 = math.tanh %259 : vector<8x32xf32>
    %261 = vector.extract_strided_slice %258 {offsets = [0, 0], sizes = [8, 32], strides = [1, 1]} : vector<8x128xf32> to vector<8x32xf32>
    %262 = vector.extract_strided_slice %258 {offsets = [0, 32], sizes = [8, 32], strides = [1, 1]} : vector<8x128xf32> to vector<8x32xf32>
    %263 = vector.extract_strided_slice %258 {offsets = [0, 96], sizes = [8, 32], strides = [1, 1]} : vector<8x128xf32> to vector<8x32xf32>
    %264 = arith.mulf %262, %215 : vector<8x32xf32>
    %265 = arith.mulf %261, %260 : vector<8x32xf32>
    %266 = arith.addf %264, %265 : vector<8x32xf32>
    %267 = math.tanh %266 : vector<8x32xf32>
    %268 = arith.mulf %263, %267 : vector<8x32xf32>
    %c0_i32_81 = arith.constant 0 : i32
    %269 = arith.cmpi sge, %244, %c0_i32_81 : i32
    %c8_i32_82 = arith.constant 8 : i32
    %270 = arith.cmpi slt, %244, %c8_i32_82 : i32
    %271 = arith.andi %269, %270 : i1
    %272 = arith.select %271, %268, %214 : vector<8x32xf32>
    %273 = arith.select %271, %266, %215 : vector<8x32xf32>
    %c1_i32_83 = arith.constant 1 : i32
    %274 = arith.subi %c4_i32, %c1_i32_83 : i32
    %275 = arith.truncf %214 : vector<8x32xf32> to vector<8x32xbf16>
    %cst_84 = arith.constant dense<0.000000e+00> : vector<8x128xf32>
    %276 = tpu.matmul %275, %1, %cst_84 {dimension_numbers = #tpu.dot_dimension_numbers<[1], [0], [0], [1], [0, 0, 1, 1], [], []>} : vector<8x32xbf16>, vector<32x128xbf16>, vector<8x128xf32> -> vector<8x128xf32>
    %277 = vector.broadcast %5 : vector<1x128xf32> to vector<8x128xf32>
    %278 = arith.addf %276, %277 : vector<8x128xf32>
    %279 = arith.truncf %242 : vector<8x32xf32> to vector<8x32xbf16>
    %cst_85 = arith.constant dense<0.000000e+00> : vector<8x128xf32>
    %280 = tpu.matmul %279, %3, %cst_85 {dimension_numbers = #tpu.dot_dimension_numbers<[1], [0], [0], [1], [0, 0, 1, 1], [], []>} : vector<8x32xbf16>, vector<32x128xbf16>, vector<8x128xf32> -> vector<8x128xf32>
    %281 = arith.addf %278, %280 : vector<8x128xf32>
    %282 = arith.negf %281 : vector<8x128xf32>
    %283 = math.exp %282 : vector<8x128xf32>
    %cst_86 = arith.constant 1.000000e+00 : f32
    %284 = vector.broadcast %cst_86 : f32 to vector<8x128xf32>
    %285 = arith.addf %284, %283 : vector<8x128xf32>
    %286 = arith.divf %284, %285 : vector<8x128xf32>
    %287 = vector.extract_strided_slice %281 {offsets = [0, 64], sizes = [8, 32], strides = [1, 1]} : vector<8x128xf32> to vector<8x32xf32>
    %288 = math.tanh %287 : vector<8x32xf32>
    %289 = vector.extract_strided_slice %286 {offsets = [0, 0], sizes = [8, 32], strides = [1, 1]} : vector<8x128xf32> to vector<8x32xf32>
    %290 = vector.extract_strided_slice %286 {offsets = [0, 32], sizes = [8, 32], strides = [1, 1]} : vector<8x128xf32> to vector<8x32xf32>
    %291 = vector.extract_strided_slice %286 {offsets = [0, 96], sizes = [8, 32], strides = [1, 1]} : vector<8x128xf32> to vector<8x32xf32>
    %292 = arith.mulf %290, %243 : vector<8x32xf32>
    %293 = arith.mulf %289, %288 : vector<8x32xf32>
    %294 = arith.addf %292, %293 : vector<8x32xf32>
    %295 = math.tanh %294 : vector<8x32xf32>
    %296 = arith.mulf %291, %295 : vector<8x32xf32>
    %c0_i32_87 = arith.constant 0 : i32
    %297 = arith.cmpi sge, %274, %c0_i32_87 : i32
    %c8_i32_88 = arith.constant 8 : i32
    %298 = arith.cmpi slt, %274, %c8_i32_88 : i32
    %299 = arith.andi %297, %298 : i1
    %300 = arith.select %299, %296, %242 : vector<8x32xf32>
    %301 = arith.select %299, %294, %243 : vector<8x32xf32>
    %c5_i32 = arith.constant 5 : i32
    %c0_i32_89 = arith.constant 0 : i32
    %302 = arith.subi %c5_i32, %c0_i32_89 : i32
    %c0_i32_90 = arith.constant 0 : i32
    %c7_i32_91 = arith.constant 7 : i32
    %303 = arith.maxsi %c0_i32_90, %302 : i32
    %304 = arith.minsi %c7_i32_91, %303 : i32
    %c8_i32_92 = arith.constant 8 : i32
    %305 = arith.muli %304, %c8_i32_92 : i32
    %306 = tpu.assume_multiple %305, 8 : i32
    %307 = arith.index_cast %306 : i32 to index
    %c0_93 = arith.constant 0 : index
    %308 = vector.load %arg10[%307, %c0_93] : memref<64x128xf32, #tpu.memory_space<vmem>>, vector<8x128xf32>
    %309 = arith.truncf %272 : vector<8x32xf32> to vector<8x32xbf16>
    %cst_94 = arith.constant dense<0.000000e+00> : vector<8x128xf32>
    %310 = tpu.matmul %309, %2, %cst_94 {dimension_numbers = #tpu.dot_dimension_numbers<[1], [0], [0], [1], [0, 0, 1, 1], [], []>} : vector<8x32xbf16>, vector<32x128xbf16>, vector<8x128xf32> -> vector<8x128xf32>
    %311 = arith.addf %308, %310 : vector<8x128xf32>
    %312 = arith.negf %311 : vector<8x128xf32>
    %313 = math.exp %312 : vector<8x128xf32>
    %cst_95 = arith.constant 1.000000e+00 : f32
    %314 = vector.broadcast %cst_95 : f32 to vector<8x128xf32>
    %315 = arith.addf %314, %313 : vector<8x128xf32>
    %316 = arith.divf %314, %315 : vector<8x128xf32>
    %317 = vector.extract_strided_slice %311 {offsets = [0, 64], sizes = [8, 32], strides = [1, 1]} : vector<8x128xf32> to vector<8x32xf32>
    %318 = math.tanh %317 : vector<8x32xf32>
    %319 = vector.extract_strided_slice %316 {offsets = [0, 0], sizes = [8, 32], strides = [1, 1]} : vector<8x128xf32> to vector<8x32xf32>
    %320 = vector.extract_strided_slice %316 {offsets = [0, 32], sizes = [8, 32], strides = [1, 1]} : vector<8x128xf32> to vector<8x32xf32>
    %321 = vector.extract_strided_slice %316 {offsets = [0, 96], sizes = [8, 32], strides = [1, 1]} : vector<8x128xf32> to vector<8x32xf32>
    %322 = arith.mulf %320, %273 : vector<8x32xf32>
    %323 = arith.mulf %319, %318 : vector<8x32xf32>
    %324 = arith.addf %322, %323 : vector<8x32xf32>
    %325 = math.tanh %324 : vector<8x32xf32>
    %326 = arith.mulf %321, %325 : vector<8x32xf32>
    %c0_i32_96 = arith.constant 0 : i32
    %327 = arith.cmpi sge, %302, %c0_i32_96 : i32
    %c8_i32_97 = arith.constant 8 : i32
    %328 = arith.cmpi slt, %302, %c8_i32_97 : i32
    %329 = arith.andi %327, %328 : i1
    %330 = arith.select %329, %326, %272 : vector<8x32xf32>
    %331 = arith.select %329, %324, %273 : vector<8x32xf32>
    %c1_i32_98 = arith.constant 1 : i32
    %332 = arith.subi %c5_i32, %c1_i32_98 : i32
    %333 = arith.truncf %272 : vector<8x32xf32> to vector<8x32xbf16>
    %cst_99 = arith.constant dense<0.000000e+00> : vector<8x128xf32>
    %334 = tpu.matmul %333, %1, %cst_99 {dimension_numbers = #tpu.dot_dimension_numbers<[1], [0], [0], [1], [0, 0, 1, 1], [], []>} : vector<8x32xbf16>, vector<32x128xbf16>, vector<8x128xf32> -> vector<8x128xf32>
    %335 = vector.broadcast %5 : vector<1x128xf32> to vector<8x128xf32>
    %336 = arith.addf %334, %335 : vector<8x128xf32>
    %337 = arith.truncf %300 : vector<8x32xf32> to vector<8x32xbf16>
    %cst_100 = arith.constant dense<0.000000e+00> : vector<8x128xf32>
    %338 = tpu.matmul %337, %3, %cst_100 {dimension_numbers = #tpu.dot_dimension_numbers<[1], [0], [0], [1], [0, 0, 1, 1], [], []>} : vector<8x32xbf16>, vector<32x128xbf16>, vector<8x128xf32> -> vector<8x128xf32>
    %339 = arith.addf %336, %338 : vector<8x128xf32>
    %340 = arith.negf %339 : vector<8x128xf32>
    %341 = math.exp %340 : vector<8x128xf32>
    %cst_101 = arith.constant 1.000000e+00 : f32
    %342 = vector.broadcast %cst_101 : f32 to vector<8x128xf32>
    %343 = arith.addf %342, %341 : vector<8x128xf32>
    %344 = arith.divf %342, %343 : vector<8x128xf32>
    %345 = vector.extract_strided_slice %339 {offsets = [0, 64], sizes = [8, 32], strides = [1, 1]} : vector<8x128xf32> to vector<8x32xf32>
    %346 = math.tanh %345 : vector<8x32xf32>
    %347 = vector.extract_strided_slice %344 {offsets = [0, 0], sizes = [8, 32], strides = [1, 1]} : vector<8x128xf32> to vector<8x32xf32>
    %348 = vector.extract_strided_slice %344 {offsets = [0, 32], sizes = [8, 32], strides = [1, 1]} : vector<8x128xf32> to vector<8x32xf32>
    %349 = vector.extract_strided_slice %344 {offsets = [0, 96], sizes = [8, 32], strides = [1, 1]} : vector<8x128xf32> to vector<8x32xf32>
    %350 = arith.mulf %348, %301 : vector<8x32xf32>
    %351 = arith.mulf %347, %346 : vector<8x32xf32>
    %352 = arith.addf %350, %351 : vector<8x32xf32>
    %353 = math.tanh %352 : vector<8x32xf32>
    %354 = arith.mulf %349, %353 : vector<8x32xf32>
    %c0_i32_102 = arith.constant 0 : i32
    %355 = arith.cmpi sge, %332, %c0_i32_102 : i32
    %c8_i32_103 = arith.constant 8 : i32
    %356 = arith.cmpi slt, %332, %c8_i32_103 : i32
    %357 = arith.andi %355, %356 : i1
    %358 = arith.select %357, %354, %300 : vector<8x32xf32>
    %359 = arith.select %357, %352, %301 : vector<8x32xf32>
    %c6_i32 = arith.constant 6 : i32
    %c0_i32_104 = arith.constant 0 : i32
    %360 = arith.subi %c6_i32, %c0_i32_104 : i32
    %c0_i32_105 = arith.constant 0 : i32
    %c7_i32_106 = arith.constant 7 : i32
    %361 = arith.maxsi %c0_i32_105, %360 : i32
    %362 = arith.minsi %c7_i32_106, %361 : i32
    %c8_i32_107 = arith.constant 8 : i32
    %363 = arith.muli %362, %c8_i32_107 : i32
    %364 = tpu.assume_multiple %363, 8 : i32
    %365 = arith.index_cast %364 : i32 to index
    %c0_108 = arith.constant 0 : index
    %366 = vector.load %arg10[%365, %c0_108] : memref<64x128xf32, #tpu.memory_space<vmem>>, vector<8x128xf32>
    %367 = arith.truncf %330 : vector<8x32xf32> to vector<8x32xbf16>
    %cst_109 = arith.constant dense<0.000000e+00> : vector<8x128xf32>
    %368 = tpu.matmul %367, %2, %cst_109 {dimension_numbers = #tpu.dot_dimension_numbers<[1], [0], [0], [1], [0, 0, 1, 1], [], []>} : vector<8x32xbf16>, vector<32x128xbf16>, vector<8x128xf32> -> vector<8x128xf32>
    %369 = arith.addf %366, %368 : vector<8x128xf32>
    %370 = arith.negf %369 : vector<8x128xf32>
    %371 = math.exp %370 : vector<8x128xf32>
    %cst_110 = arith.constant 1.000000e+00 : f32
    %372 = vector.broadcast %cst_110 : f32 to vector<8x128xf32>
    %373 = arith.addf %372, %371 : vector<8x128xf32>
    %374 = arith.divf %372, %373 : vector<8x128xf32>
    %375 = vector.extract_strided_slice %369 {offsets = [0, 64], sizes = [8, 32], strides = [1, 1]} : vector<8x128xf32> to vector<8x32xf32>
    %376 = math.tanh %375 : vector<8x32xf32>
    %377 = vector.extract_strided_slice %374 {offsets = [0, 0], sizes = [8, 32], strides = [1, 1]} : vector<8x128xf32> to vector<8x32xf32>
    %378 = vector.extract_strided_slice %374 {offsets = [0, 32], sizes = [8, 32], strides = [1, 1]} : vector<8x128xf32> to vector<8x32xf32>
    %379 = vector.extract_strided_slice %374 {offsets = [0, 96], sizes = [8, 32], strides = [1, 1]} : vector<8x128xf32> to vector<8x32xf32>
    %380 = arith.mulf %378, %331 : vector<8x32xf32>
    %381 = arith.mulf %377, %376 : vector<8x32xf32>
    %382 = arith.addf %380, %381 : vector<8x32xf32>
    %383 = math.tanh %382 : vector<8x32xf32>
    %384 = arith.mulf %379, %383 : vector<8x32xf32>
    %c0_i32_111 = arith.constant 0 : i32
    %385 = arith.cmpi sge, %360, %c0_i32_111 : i32
    %c8_i32_112 = arith.constant 8 : i32
    %386 = arith.cmpi slt, %360, %c8_i32_112 : i32
    %387 = arith.andi %385, %386 : i1
    %388 = arith.select %387, %384, %330 : vector<8x32xf32>
    %389 = arith.select %387, %382, %331 : vector<8x32xf32>
    %c1_i32_113 = arith.constant 1 : i32
    %390 = arith.subi %c6_i32, %c1_i32_113 : i32
    %391 = arith.truncf %330 : vector<8x32xf32> to vector<8x32xbf16>
    %cst_114 = arith.constant dense<0.000000e+00> : vector<8x128xf32>
    %392 = tpu.matmul %391, %1, %cst_114 {dimension_numbers = #tpu.dot_dimension_numbers<[1], [0], [0], [1], [0, 0, 1, 1], [], []>} : vector<8x32xbf16>, vector<32x128xbf16>, vector<8x128xf32> -> vector<8x128xf32>
    %393 = vector.broadcast %5 : vector<1x128xf32> to vector<8x128xf32>
    %394 = arith.addf %392, %393 : vector<8x128xf32>
    %395 = arith.truncf %358 : vector<8x32xf32> to vector<8x32xbf16>
    %cst_115 = arith.constant dense<0.000000e+00> : vector<8x128xf32>
    %396 = tpu.matmul %395, %3, %cst_115 {dimension_numbers = #tpu.dot_dimension_numbers<[1], [0], [0], [1], [0, 0, 1, 1], [], []>} : vector<8x32xbf16>, vector<32x128xbf16>, vector<8x128xf32> -> vector<8x128xf32>
    %397 = arith.addf %394, %396 : vector<8x128xf32>
    %398 = arith.negf %397 : vector<8x128xf32>
    %399 = math.exp %398 : vector<8x128xf32>
    %cst_116 = arith.constant 1.000000e+00 : f32
    %400 = vector.broadcast %cst_116 : f32 to vector<8x128xf32>
    %401 = arith.addf %400, %399 : vector<8x128xf32>
    %402 = arith.divf %400, %401 : vector<8x128xf32>
    %403 = vector.extract_strided_slice %397 {offsets = [0, 64], sizes = [8, 32], strides = [1, 1]} : vector<8x128xf32> to vector<8x32xf32>
    %404 = math.tanh %403 : vector<8x32xf32>
    %405 = vector.extract_strided_slice %402 {offsets = [0, 0], sizes = [8, 32], strides = [1, 1]} : vector<8x128xf32> to vector<8x32xf32>
    %406 = vector.extract_strided_slice %402 {offsets = [0, 32], sizes = [8, 32], strides = [1, 1]} : vector<8x128xf32> to vector<8x32xf32>
    %407 = vector.extract_strided_slice %402 {offsets = [0, 96], sizes = [8, 32], strides = [1, 1]} : vector<8x128xf32> to vector<8x32xf32>
    %408 = arith.mulf %406, %359 : vector<8x32xf32>
    %409 = arith.mulf %405, %404 : vector<8x32xf32>
    %410 = arith.addf %408, %409 : vector<8x32xf32>
    %411 = math.tanh %410 : vector<8x32xf32>
    %412 = arith.mulf %407, %411 : vector<8x32xf32>
    %c0_i32_117 = arith.constant 0 : i32
    %413 = arith.cmpi sge, %390, %c0_i32_117 : i32
    %c8_i32_118 = arith.constant 8 : i32
    %414 = arith.cmpi slt, %390, %c8_i32_118 : i32
    %415 = arith.andi %413, %414 : i1
    %416 = arith.select %415, %412, %358 : vector<8x32xf32>
    %417 = arith.select %415, %410, %359 : vector<8x32xf32>
    %c7_i32_119 = arith.constant 7 : i32
    %c0_i32_120 = arith.constant 0 : i32
    %418 = arith.subi %c7_i32_119, %c0_i32_120 : i32
    %c0_i32_121 = arith.constant 0 : i32
    %c7_i32_122 = arith.constant 7 : i32
    %419 = arith.maxsi %c0_i32_121, %418 : i32
    %420 = arith.minsi %c7_i32_122, %419 : i32
    %c8_i32_123 = arith.constant 8 : i32
    %421 = arith.muli %420, %c8_i32_123 : i32
    %422 = tpu.assume_multiple %421, 8 : i32
    %423 = arith.index_cast %422 : i32 to index
    %c0_124 = arith.constant 0 : index
    %424 = vector.load %arg10[%423, %c0_124] : memref<64x128xf32, #tpu.memory_space<vmem>>, vector<8x128xf32>
    %425 = arith.truncf %388 : vector<8x32xf32> to vector<8x32xbf16>
    %cst_125 = arith.constant dense<0.000000e+00> : vector<8x128xf32>
    %426 = tpu.matmul %425, %2, %cst_125 {dimension_numbers = #tpu.dot_dimension_numbers<[1], [0], [0], [1], [0, 0, 1, 1], [], []>} : vector<8x32xbf16>, vector<32x128xbf16>, vector<8x128xf32> -> vector<8x128xf32>
    %427 = arith.addf %424, %426 : vector<8x128xf32>
    %428 = arith.negf %427 : vector<8x128xf32>
    %429 = math.exp %428 : vector<8x128xf32>
    %cst_126 = arith.constant 1.000000e+00 : f32
    %430 = vector.broadcast %cst_126 : f32 to vector<8x128xf32>
    %431 = arith.addf %430, %429 : vector<8x128xf32>
    %432 = arith.divf %430, %431 : vector<8x128xf32>
    %433 = vector.extract_strided_slice %427 {offsets = [0, 64], sizes = [8, 32], strides = [1, 1]} : vector<8x128xf32> to vector<8x32xf32>
    %434 = math.tanh %433 : vector<8x32xf32>
    %435 = vector.extract_strided_slice %432 {offsets = [0, 0], sizes = [8, 32], strides = [1, 1]} : vector<8x128xf32> to vector<8x32xf32>
    %436 = vector.extract_strided_slice %432 {offsets = [0, 32], sizes = [8, 32], strides = [1, 1]} : vector<8x128xf32> to vector<8x32xf32>
    %437 = vector.extract_strided_slice %432 {offsets = [0, 96], sizes = [8, 32], strides = [1, 1]} : vector<8x128xf32> to vector<8x32xf32>
    %438 = arith.mulf %436, %389 : vector<8x32xf32>
    %439 = arith.mulf %435, %434 : vector<8x32xf32>
    %440 = arith.addf %438, %439 : vector<8x32xf32>
    %441 = math.tanh %440 : vector<8x32xf32>
    %442 = arith.mulf %437, %441 : vector<8x32xf32>
    %c0_i32_127 = arith.constant 0 : i32
    %443 = arith.cmpi sge, %418, %c0_i32_127 : i32
    %c8_i32_128 = arith.constant 8 : i32
    %444 = arith.cmpi slt, %418, %c8_i32_128 : i32
    %445 = arith.andi %443, %444 : i1
    %446 = arith.select %445, %442, %388 : vector<8x32xf32>
    %447 = arith.select %445, %440, %389 : vector<8x32xf32>
    %c1_i32_129 = arith.constant 1 : i32
    %448 = arith.subi %c7_i32_119, %c1_i32_129 : i32
    %449 = arith.truncf %388 : vector<8x32xf32> to vector<8x32xbf16>
    %cst_130 = arith.constant dense<0.000000e+00> : vector<8x128xf32>
    %450 = tpu.matmul %449, %1, %cst_130 {dimension_numbers = #tpu.dot_dimension_numbers<[1], [0], [0], [1], [0, 0, 1, 1], [], []>} : vector<8x32xbf16>, vector<32x128xbf16>, vector<8x128xf32> -> vector<8x128xf32>
    %451 = vector.broadcast %5 : vector<1x128xf32> to vector<8x128xf32>
    %452 = arith.addf %450, %451 : vector<8x128xf32>
    %453 = arith.truncf %416 : vector<8x32xf32> to vector<8x32xbf16>
    %cst_131 = arith.constant dense<0.000000e+00> : vector<8x128xf32>
    %454 = tpu.matmul %453, %3, %cst_131 {dimension_numbers = #tpu.dot_dimension_numbers<[1], [0], [0], [1], [0, 0, 1, 1], [], []>} : vector<8x32xbf16>, vector<32x128xbf16>, vector<8x128xf32> -> vector<8x128xf32>
    %455 = arith.addf %452, %454 : vector<8x128xf32>
    %456 = arith.negf %455 : vector<8x128xf32>
    %457 = math.exp %456 : vector<8x128xf32>
    %cst_132 = arith.constant 1.000000e+00 : f32
    %458 = vector.broadcast %cst_132 : f32 to vector<8x128xf32>
    %459 = arith.addf %458, %457 : vector<8x128xf32>
    %460 = arith.divf %458, %459 : vector<8x128xf32>
    %461 = vector.extract_strided_slice %455 {offsets = [0, 64], sizes = [8, 32], strides = [1, 1]} : vector<8x128xf32> to vector<8x32xf32>
    %462 = math.tanh %461 : vector<8x32xf32>
    %463 = vector.extract_strided_slice %460 {offsets = [0, 0], sizes = [8, 32], strides = [1, 1]} : vector<8x128xf32> to vector<8x32xf32>
    %464 = vector.extract_strided_slice %460 {offsets = [0, 32], sizes = [8, 32], strides = [1, 1]} : vector<8x128xf32> to vector<8x32xf32>
    %465 = vector.extract_strided_slice %460 {offsets = [0, 96], sizes = [8, 32], strides = [1, 1]} : vector<8x128xf32> to vector<8x32xf32>
    %466 = arith.mulf %464, %417 : vector<8x32xf32>
    %467 = arith.mulf %463, %462 : vector<8x32xf32>
    %468 = arith.addf %466, %467 : vector<8x32xf32>
    %469 = math.tanh %468 : vector<8x32xf32>
    %470 = arith.mulf %465, %469 : vector<8x32xf32>
    %c0_i32_133 = arith.constant 0 : i32
    %471 = arith.cmpi sge, %448, %c0_i32_133 : i32
    %c8_i32_134 = arith.constant 8 : i32
    %472 = arith.cmpi slt, %448, %c8_i32_134 : i32
    %473 = arith.andi %471, %472 : i1
    %474 = arith.select %473, %470, %416 : vector<8x32xf32>
    %475 = arith.select %473, %468, %417 : vector<8x32xf32>
    %c8_i32_135 = arith.constant 8 : i32
    %c0_i32_136 = arith.constant 0 : i32
    %476 = arith.subi %c8_i32_135, %c0_i32_136 : i32
    %c0_i32_137 = arith.constant 0 : i32
    %c7_i32_138 = arith.constant 7 : i32
    %477 = arith.maxsi %c0_i32_137, %476 : i32
    %478 = arith.minsi %c7_i32_138, %477 : i32
    %c8_i32_139 = arith.constant 8 : i32
    %479 = arith.muli %478, %c8_i32_139 : i32
    %480 = tpu.assume_multiple %479, 8 : i32
    %481 = arith.index_cast %480 : i32 to index
    %c0_140 = arith.constant 0 : index
    %482 = vector.load %arg10[%481, %c0_140] : memref<64x128xf32, #tpu.memory_space<vmem>>, vector<8x128xf32>
    %483 = arith.truncf %446 : vector<8x32xf32> to vector<8x32xbf16>
    %cst_141 = arith.constant dense<0.000000e+00> : vector<8x128xf32>
    %484 = tpu.matmul %483, %2, %cst_141 {dimension_numbers = #tpu.dot_dimension_numbers<[1], [0], [0], [1], [0, 0, 1, 1], [], []>} : vector<8x32xbf16>, vector<32x128xbf16>, vector<8x128xf32> -> vector<8x128xf32>
    %485 = arith.addf %482, %484 : vector<8x128xf32>
    %486 = arith.negf %485 : vector<8x128xf32>
    %487 = math.exp %486 : vector<8x128xf32>
    %cst_142 = arith.constant 1.000000e+00 : f32
    %488 = vector.broadcast %cst_142 : f32 to vector<8x128xf32>
    %489 = arith.addf %488, %487 : vector<8x128xf32>
    %490 = arith.divf %488, %489 : vector<8x128xf32>
    %491 = vector.extract_strided_slice %485 {offsets = [0, 64], sizes = [8, 32], strides = [1, 1]} : vector<8x128xf32> to vector<8x32xf32>
    %492 = math.tanh %491 : vector<8x32xf32>
    %493 = vector.extract_strided_slice %490 {offsets = [0, 0], sizes = [8, 32], strides = [1, 1]} : vector<8x128xf32> to vector<8x32xf32>
    %494 = vector.extract_strided_slice %490 {offsets = [0, 32], sizes = [8, 32], strides = [1, 1]} : vector<8x128xf32> to vector<8x32xf32>
    %495 = vector.extract_strided_slice %490 {offsets = [0, 96], sizes = [8, 32], strides = [1, 1]} : vector<8x128xf32> to vector<8x32xf32>
    %496 = arith.mulf %494, %447 : vector<8x32xf32>
    %497 = arith.mulf %493, %492 : vector<8x32xf32>
    %498 = arith.addf %496, %497 : vector<8x32xf32>
    %499 = math.tanh %498 : vector<8x32xf32>
    %500 = arith.mulf %495, %499 : vector<8x32xf32>
    %c0_i32_143 = arith.constant 0 : i32
    %501 = arith.cmpi sge, %476, %c0_i32_143 : i32
    %c8_i32_144 = arith.constant 8 : i32
    %502 = arith.cmpi slt, %476, %c8_i32_144 : i32
    %503 = arith.andi %501, %502 : i1
    %504 = arith.select %503, %500, %446 : vector<8x32xf32>
    %505 = arith.select %503, %498, %447 : vector<8x32xf32>
    %c1_i32_145 = arith.constant 1 : i32
    %506 = arith.subi %c8_i32_135, %c1_i32_145 : i32
    %507 = arith.truncf %446 : vector<8x32xf32> to vector<8x32xbf16>
    %cst_146 = arith.constant dense<0.000000e+00> : vector<8x128xf32>
    %508 = tpu.matmul %507, %1, %cst_146 {dimension_numbers = #tpu.dot_dimension_numbers<[1], [0], [0], [1], [0, 0, 1, 1], [], []>} : vector<8x32xbf16>, vector<32x128xbf16>, vector<8x128xf32> -> vector<8x128xf32>
    %509 = vector.broadcast %5 : vector<1x128xf32> to vector<8x128xf32>
    %510 = arith.addf %508, %509 : vector<8x128xf32>
    %511 = arith.truncf %474 : vector<8x32xf32> to vector<8x32xbf16>
    %cst_147 = arith.constant dense<0.000000e+00> : vector<8x128xf32>
    %512 = tpu.matmul %511, %3, %cst_147 {dimension_numbers = #tpu.dot_dimension_numbers<[1], [0], [0], [1], [0, 0, 1, 1], [], []>} : vector<8x32xbf16>, vector<32x128xbf16>, vector<8x128xf32> -> vector<8x128xf32>
    %513 = arith.addf %510, %512 : vector<8x128xf32>
    %514 = arith.negf %513 : vector<8x128xf32>
    %515 = math.exp %514 : vector<8x128xf32>
    %cst_148 = arith.constant 1.000000e+00 : f32
    %516 = vector.broadcast %cst_148 : f32 to vector<8x128xf32>
    %517 = arith.addf %516, %515 : vector<8x128xf32>
    %518 = arith.divf %516, %517 : vector<8x128xf32>
    %519 = vector.extract_strided_slice %513 {offsets = [0, 64], sizes = [8, 32], strides = [1, 1]} : vector<8x128xf32> to vector<8x32xf32>
    %520 = math.tanh %519 : vector<8x32xf32>
    %521 = vector.extract_strided_slice %518 {offsets = [0, 0], sizes = [8, 32], strides = [1, 1]} : vector<8x128xf32> to vector<8x32xf32>
    %522 = vector.extract_strided_slice %518 {offsets = [0, 32], sizes = [8, 32], strides = [1, 1]} : vector<8x128xf32> to vector<8x32xf32>
    %523 = vector.extract_strided_slice %518 {offsets = [0, 96], sizes = [8, 32], strides = [1, 1]} : vector<8x128xf32> to vector<8x32xf32>
    %524 = arith.mulf %522, %475 : vector<8x32xf32>
    %525 = arith.mulf %521, %520 : vector<8x32xf32>
    %526 = arith.addf %524, %525 : vector<8x32xf32>
    %527 = math.tanh %526 : vector<8x32xf32>
    %528 = arith.mulf %523, %527 : vector<8x32xf32>
    %c0_i32_149 = arith.constant 0 : i32
    %529 = arith.cmpi sge, %506, %c0_i32_149 : i32
    %c8_i32_150 = arith.constant 8 : i32
    %530 = arith.cmpi slt, %506, %c8_i32_150 : i32
    %531 = arith.andi %529, %530 : i1
    %532 = arith.select %531, %528, %474 : vector<8x32xf32>
    %533 = arith.select %531, %526, %475 : vector<8x32xf32>
    %c9_i32 = arith.constant 9 : i32
    %c0_151 = arith.constant 0 : index
    %c0_152 = arith.constant 0 : index
    %534 = vector.load %arg7[%c0_151, %c0_152] : memref<32x8xbf16, #tpu.memory_space<vmem>>, vector<32x8xbf16>
    %535 = arith.truncf %532 : vector<8x32xf32> to vector<8x32xbf16>
    %cst_153 = arith.constant dense<0.000000e+00> : vector<8x8xf32>
    %536 = tpu.matmul %535, %534, %cst_153 {dimension_numbers = #tpu.dot_dimension_numbers<[1], [0], [0], [1], [0, 0, 1, 1], [], []>} : vector<8x32xbf16>, vector<32x8xbf16>, vector<8x8xf32> -> vector<8x8xf32>
    %c0_154 = arith.constant 0 : index
    %c0_155 = arith.constant 0 : index
    %537 = vector.load %arg8[%c0_154, %c0_155] : memref<1x8xf32, #tpu.memory_space<vmem>>, vector<1x8xf32>
    %538 = vector.broadcast %537 : vector<1x8xf32> to vector<8x8xf32>
    %539 = arith.addf %536, %538 : vector<8x8xf32>
    %c0_156 = arith.constant 0 : index
    %c0_157 = arith.constant 0 : index
    %540 = vector.load %arg9[%c0_156, %c0_157] : memref<8x8xf32, #tpu.memory_space<vmem>>, vector<8x8xf32>
    tpu.vector_store %arg9[%c0_156, %c0_157], %539 {strides = array<i32>} : memref<8x8xf32, #tpu.memory_space<vmem>>, vector<8x8xf32>,
    return
  }
}

</mosaic_0001>

<llo_original>
// kernel: lstm_model_forward.1
$region0: #{lstm_model_forward.1}
  #allocation0 [shape = 'u32[]', space=smem, size = 0x4, offset = 0x4, fixed_abs, tag = 'smem constant byte address 0x4 - core index']
  #allocation1 [shape = 'u32[72,128]{1,0:T(1,128)}', space=vmem, size = 0x9000, scoped, tag = 'internal scratch']
  #allocation2 [shape = 'f32[64,128]{1,0:T(8,128)}', space=vmem, size = 0x8000, scoped, tag = 'scratch operand']
  %s0 = inlined_call_operand.vmem [shape: bf16[64,16], index: 0, kind: input, shape index: {}]
  %s1 = inlined_call_operand.vmem [shape: bf16[16,128], index: 1, kind: input, shape index: {}]
  %s2 = inlined_call_operand.vmem [shape: bf16[32,128], index: 2, kind: input, shape index: {}]
  %s3 = inlined_call_operand.vmem [shape: f32[1,128], index: 3, kind: input, shape index: {}]
  %s4 = inlined_call_operand.vmem [shape: bf16[32,128], index: 4, kind: input, shape index: {}]
  %s5 = inlined_call_operand.vmem [shape: bf16[32,128], index: 5, kind: input, shape index: {}]
  %s6 = inlined_call_operand.vmem [shape: f32[1,128], index: 6, kind: input, shape index: {}]
  %s7 = inlined_call_operand.vmem [shape: bf16[32,8], index: 7, kind: input, shape index: {}]
  %s8 = inlined_call_operand.vmem [shape: f32[1,8], index: 8, kind: input, shape index: {}]
  %s9 = inlined_call_operand.hbm [shape: f32[8,8], index: 9, kind: output, shape index: {}]
  %s10 = sld [smem:[#allocation0]]
  $region46: #{lstm_model_forward.1} parent=0
    _
  %s12 = ssub.s32 1, %s10
  %s13 = scalar_select 0, %s12, %s10
  $region1: #{lstm_model_forward.1} parent=0
    #allocation3 [shape = 'u8[4096]{0}', space=vmem, size = 0x1000, scoped, tag = 'output window, operand 0, single buffered']
    #allocation4 [shape = 's32[1]{0}', space=sflag, size = 0x4, scoped, tag = 'scoped memory for lstm_model_forward.1']
    %14 = vsyncpa [#allocation4], 0
    // Predicated region
    $region2: #{lstm_model_forward.1} parent=1 // pred_check
      _
    $region3: #{lstm_model_forward.1} parent=1 // pred_check_branch
      %16 = sbr.rel (0) target = $region5
    $region4: #{lstm_model_forward.1} parent=1 // pred_region
      _
    $region5: #{lstm_model_forward.1} parent=1 // pred_fallthru
      _
    // Predicated region
    $region6: #{lstm_model_forward.1} parent=1 // pred_check
      _
    $region7: #{lstm_model_forward.1} parent=1 // pred_check_branch
      %18 = sbr.rel (0) target = $region9
    $region8: #{lstm_model_forward.1} parent=1 // pred_region
      _
    $region9: #{lstm_model_forward.1} parent=1 // pred_fallthru
      _
    // Predicated region
    $region10: #{lstm_model_forward.1} parent=1 // pred_check
      _
    $region11: #{lstm_model_forward.1} parent=1 // pred_check_branch
      %20 = sbr.rel (0) target = $region13
    $region12: #{lstm_model_forward.1} parent=1 // pred_region
      _
    $region13: #{lstm_model_forward.1} parent=1 // pred_fallthru
      _
    // Predicated region
    $region14: #{lstm_model_forward.1} parent=1 // pred_check
      _
    $region15: #{lstm_model_forward.1} parent=1 // pred_check_branch
      %22 = sbr.rel (0) target = $region17
    $region16: #{lstm_model_forward.1} parent=1 // pred_region
      _
    $region17: #{lstm_model_forward.1} parent=1 // pred_fallthru
      _
    // Predicated region
    $region18: #{lstm_model_forward.1} parent=1 // pred_check
      _
    $region19: #{lstm_model_forward.1} parent=1 // pred_check_branch
      %24 = sbr.rel (0) target = $region21
    $region20: #{lstm_model_forward.1} parent=1 // pred_region
      _
    $region21: #{lstm_model_forward.1} parent=1 // pred_fallthru
      _
    // Predicated region
    $region22: #{lstm_model_forward.1} parent=1 // pred_check
      _
    $region23: #{lstm_model_forward.1} parent=1 // pred_check_branch
      %26 = sbr.rel (0) target = $region25
    $region24: #{lstm_model_forward.1} parent=1 // pred_region
      _
    $region25: #{lstm_model_forward.1} parent=1 // pred_fallthru
      _
    // Predicated region
    $region26: #{lstm_model_forward.1} parent=1 // pred_check
      _
    $region27: #{lstm_model_forward.1} parent=1 // pred_check_branch
      %28 = sbr.rel (0) target = $region29
    $region28: #{lstm_model_forward.1} parent=1 // pred_region
      _
    $region29: #{lstm_model_forward.1} parent=1 // pred_fallthru
      _
    // Predicated region
    $region30: #{lstm_model_forward.1} parent=1 // pred_check
      _
    $region31: #{lstm_model_forward.1} parent=1 // pred_check_branch
      %30 = sbr.rel (0) target = $region33
    $region32: #{lstm_model_forward.1} parent=1 // pred_region
      _
    $region33: #{lstm_model_forward.1} parent=1 // pred_fallthru
      _
    // Predicated region
    $region34: #{lstm_model_forward.1} parent=1 // pred_check
      _
    $region35: #{lstm_model_forward.1} parent=1 // pred_check_branch
      %32 = sbr.rel (0) target = $region37
    $region36: #{lstm_model_forward.1} parent=1 // pred_region
      _
    $region37: #{lstm_model_forward.1} parent=1 // pred_fallthru
      _
    %v34 = vld [vmem:[%s1] sm:$0xf]
    %v35 = vld [vmem:[%s1 + $0x4] sm:$0xf]
    %v36 = vld [vmem:[%s4] sm:$0xf]
    %v37 = vld [vmem:[%s4 + $0x4] sm:$0xf]
    %v38 = vld [vmem:[%s4 + $0x8] sm:$0xf]
    %v39 = vld [vmem:[%s4 + $0xc] sm:$0xf]
    %v40 = vld [vmem:[%s2] sm:$0xf]
    %v41 = vld [vmem:[%s2 + $0x4] sm:$0xf]
    %v42 = vld [vmem:[%s2 + $0x8] sm:$0xf]
    %v43 = vld [vmem:[%s2 + $0xc] sm:$0xf]
    %v44 = vld [vmem:[%s5] sm:$0xf]
    %v45 = vld [vmem:[%s5 + $0x4] sm:$0xf]
    %v46 = vld [vmem:[%s5 + $0x8] sm:$0xf]
    %v47 = vld [vmem:[%s5 + $0xc] sm:$0xf]
    %v48 = vld [vmem:[%s3] sm:$0x1]
    %v49 = vld [vmem:[%s6] sm:$0x1]
    %v50 = vld [vmem:[%s0] sm:$0xf]
    %v51 = vld [vmem:[%s0 + $0x4] sm:$0xf]
    %v52 = vld [vmem:[%s0 + $0x8] sm:$0xf]
    %v53 = vld [vmem:[%s0 + $0xc] sm:$0xf]
    %v54 = vld [vmem:[%s0 + $0x10] sm:$0xf]
    %v55 = vld [vmem:[%s0 + $0x14] sm:$0xf]
    %v56 = vld [vmem:[%s0 + $0x18] sm:$0xf]
    %v57 = vld [vmem:[%s0 + $0x1c] sm:$0xf]
    %v59 = vperm.slane %v48, 0
    %v69 = vunpack.c.l.b16 %v50
    %v70 = vunpack.c.l.b16 %v51
    %v71 = vunpack.c.l.b16 %v52
    %v72 = vunpack.c.l.b16 %v53
    %v73 = vunpack.c.l.b16 %v54
    %v74 = vunpack.c.l.b16 %v55
    %v75 = vunpack.c.l.b16 %v56
    %v76 = vunpack.c.l.b16 %v57
    %v77 = vpack.c.b16 %v70, %v69
    %v78 = vpack.c.b16 %v72, %v71
    %v79 = vpack.c.b16 %v74, %v73
    %v80 = vpack.c.b16 %v76, %v75
    %v83 = vunpack.c.l.b16 %v34
    %v84 = vunpack.c.l.b16 %v35
    %v85 = vpack.c.b16 %v84, %v83
    %vm87 = vcmask 130048
    %v89 = vsel %vm87, %v77, 0
    %v92 = vsel %vm87, %v78, 0
    %v95 = vsel %vm87, %v79, 0
    %v98 = vsel %vm87, %v80, 0
    %100 = vmatpush.bf16.msra.mxu0 0
    %101 = vmatpush.bf16.msra.mxu0 0
    %102 = vmatpush.bf16.msra.mxu0 0
    %103 = vmatpush.bf16.msra.mxu0 0
    %104 = vmatpush.bf16.msra.mxu0 0
    %105 = vmatpush.bf16.msra.mxu0 0
    %106 = vmatpush.bf16.msra.mxu0 0
    %107 = vmatpush.bf16.msra.mxu0 %v85
    %108 = vmatmul.bf16.gmra.mxu0 %v89
    %v109 = vpop.f32.mrf.mxu0
    %v110 = vadd.f32 %v59, %v109
    %v111 = vpop.f32.mrf.mxu0
    %v112 = vadd.f32 %v59, %v111
    %113 = vmatmul.bf16.gmra.mxu0 %v92
    %v114 = vpop.f32.mrf.mxu0
    %v115 = vadd.f32 %v59, %v114
    %v116 = vpop.f32.mrf.mxu0
    %v117 = vadd.f32 %v59, %v116
    %118 = vmatmul.bf16.gmra.mxu0 %v95
    %v119 = vpop.f32.mrf.mxu0
    %v120 = vadd.f32 %v59, %v119
    %v121 = vpop.f32.mrf.mxu0
    %v122 = vadd.f32 %v59, %v121
    %123 = vmatmul.bf16.gmra.mxu0 %v98
    %v124 = vpop.f32.mrf.mxu0
    %v125 = vadd.f32 %v59, %v124
    %v126 = vpop.f32.mrf.mxu0
    %v127 = vadd.f32 %v59, %v126
    %128 = vdwg.mxu0
    %129 = vst [vmem:[#allocation2] sm:$0xff] %v110
    %130 = vst [vmem:[#allocation2 + $0x8] sm:$0xff] %v112
    %131 = vst [vmem:[#allocation2 + $0x10] sm:$0xff] %v115
    %132 = vst [vmem:[#allocation2 + $0x18] sm:$0xff] %v117
    %133 = vst [vmem:[#allocation2 + $0x20] sm:$0xff] %v120
    %134 = vst [vmem:[#allocation2 + $0x28] sm:$0xff] %v122
    %135 = vst [vmem:[#allocation2 + $0x30] sm:$0xff] %v125
    %136 = vst [vmem:[#allocation2 + $0x38] sm:$0xff] %v127
    %v137 = vld [vmem:[#allocation2] sm:$0xff]
    %v142 = vunpack.c.l.b16 %v40
    %v143 = vunpack.c.l.b16 %v41
    %v144 = vunpack.c.l.b16 %v42
    %v145 = vunpack.c.l.b16 %v43
    %v146 = vpack.c.b16 %v143, %v142
    %v147 = vpack.c.b16 %v145, %v144
    %vm150 = vcmask 261120
    %v152 = vsel %vm150, 0, 0
    %154 = vmatpush.bf16.msra.mxu0 0
    %155 = vmatpush.bf16.msra.mxu0 0
    %156 = vmatpush.bf16.msra.mxu0 0
    %157 = vmatpush.bf16.msra.mxu0 0
    %158 = vmatpush.bf16.msra.mxu0 0
    %159 = vmatpush.bf16.msra.mxu0 0
    %160 = vmatpush.bf16.msra.mxu0 %v147
    %161 = vmatpush.bf16.msra.mxu0 %v146
    %162 = vmatmul.bf16.gmra.mxu0 %v152
    %v163 = vpop.f32.mrf.mxu0
    %v164 = vadd.f32 0.0, %v163
    %v165 = vpop.f32.mrf.mxu0
    %166 = vdwg.mxu0
    %v167 = vadd.f32 %v137, %v164
    %v168 = vxor.u32 %v167, 2147483648
    %v169 = vmul.f32 %v168, 1.442695
    %v170 = vpow.pop %v169
    %v171 = vadd.f32 %v170, 1.0
    %v172 = vrcp.pop %v171
    %v173 = vmul.f32 %v171, %v172
    %v174 = vsub.f32 1.0, %v173
    %v175 = vmul.f32 %v172, %v174
    %v176 = vadd.f32 %v172, %v175
    %vm177 = vweird.f32 %v171
    %vm178 = vweird.f32 %v172
    %vm179 = vmor %vm177, %vm178
    %v180 = vsel %vm179, %v172, %v176
    %v181 = vand.u32 2147483647, %v171
    %vm182 = vcmp.eq.f32.partialorder %v181, 8.507059e+37
    %v183 = vand.u32 %v171, 2147483648
    %v184 = vor.u32 1.1754944e-38, %v183
    %v185 = vsel %vm182, %v184, %v180
    %v186 = vmul.f32 1.0, %v185
    %v187 = vtanh.pop %v167
    %v188 = vmul.f32 %v186, 0.0
    %190 = vrot.lane.b32.xlu0 %v187, 64
    %v191 = vpop.permute.xlu0 %190
    %v193 = vmul.f32 %v186, %v191
    %195 = vrot.lane.b32.xlu0 %v193, 32
    %v196 = vpop.permute.xlu0 %195
    %v198 = vadd.f32 %v188, %v196
    %v199 = vtanh.pop %v198
    %201 = vrot.lane.b32.xlu0 %v199, 64
    %v202 = vpop.permute.xlu0 %201
    %v204 = vmul.f32 %v186, %v202
    %s205 = scalar_lea.vmem [#allocation2], 8
    %v206 = vld [vmem:[%s205] sm:$0xff]
    %v207 = vpack.c.bf16 %v204, %v204
    %209 = vrot.lane.b32.xlu0 %v207, 32
    %v210 = vpop.permute.xlu0 %209
    %v212 = vsel %vm150, %v210, 0
    %214 = vmatpush.bf16.msra.mxu0 0
    %215 = vmatpush.bf16.msra.mxu0 0
    %216 = vmatpush.bf16.msra.mxu0 0
    %217 = vmatpush.bf16.msra.mxu0 0
    %218 = vmatpush.bf16.msra.mxu0 0
    %219 = vmatpush.bf16.msra.mxu0 0
    %220 = vmatpush.bf16.msra.mxu0 %v147
    %221 = vmatpush.bf16.msra.mxu0 %v146
    %222 = vmatmul.bf16.gmra.mxu0 %v212
    %v223 = vpop.f32.mrf.mxu0
    %v224 = vadd.f32 0.0, %v223
    %v225 = vpop.f32.mrf.mxu0
    %226 = vdwg.mxu0
    %v227 = vadd.f32 %v206, %v224
    %v228 = vxor.u32 %v227, 2147483648
    %v229 = vmul.f32 %v228, 1.442695
    %v230 = vpow.pop %v229
    %v231 = vadd.f32 %v230, 1.0
    %v232 = vrcp.pop %v231
    %v233 = vmul.f32 %v231, %v232
    %v234 = vsub.f32 1.0, %v233
    %v235 = vmul.f32 %v232, %v234
    %v236 = vadd.f32 %v232, %v235
    %vm237 = vweird.f32 %v231
    %vm238 = vweird.f32 %v232
    %vm239 = vmor %vm237, %vm238
    %v240 = vsel %vm239, %v232, %v236
    %v241 = vand.u32 2147483647, %v231
    %vm242 = vcmp.eq.f32.partialorder %v241, 8.507059e+37
    %v243 = vand.u32 %v231, 2147483648
    %v244 = vor.u32 1.1754944e-38, %v243
    %v245 = vsel %vm242, %v244, %v240
    %v246 = vmul.f32 1.0, %v245
    %v247 = vtanh.pop %v227
    %v248 = vmul.f32 %v246, %v198
    %250 = vrot.lane.b32.xlu0 %v247, 64
    %v251 = vpop.permute.xlu0 %250
    %v253 = vmul.f32 %v246, %v251
    %255 = vrot.lane.b32.xlu0 %v253, 32
    %v256 = vpop.permute.xlu0 %255
    %v258 = vadd.f32 %v248, %v256
    %v259 = vtanh.pop %v258
    %261 = vrot.lane.b32.xlu0 %v259, 64
    %v262 = vpop.permute.xlu0 %261
    %v264 = vmul.f32 %v246, %v262
    %v266 = vperm.slane %v49, 0
    %v272 = vunpack.c.l.b16 %v36
    %v273 = vunpack.c.l.b16 %v37
    %v274 = vunpack.c.l.b16 %v38
    %v275 = vunpack.c.l.b16 %v39
    %v276 = vpack.c.b16 %v273, %v272
    %v277 = vpack.c.b16 %v275, %v274
    %280 = vmatpush.bf16.msra.mxu0 0
    %281 = vmatpush.bf16.msra.mxu0 0
    %282 = vmatpush.bf16.msra.mxu0 0
    %283 = vmatpush.bf16.msra.mxu0 0
    %284 = vmatpush.bf16.msra.mxu0 0
    %285 = vmatpush.bf16.msra.mxu0 0
    %286 = vmatpush.bf16.msra.mxu0 %v277
    %287 = vmatpush.bf16.msra.mxu0 %v276
    %288 = vmatmul.bf16.gmra.mxu0 %v212
    %v289 = vpop.f32.mrf.mxu0
    %v290 = vadd.f32 %v266, %v289
    %v291 = vpop.f32.mrf.mxu0
    %292 = vdwg.mxu0
    %v297 = vunpack.c.l.b16 %v44
    %v298 = vunpack.c.l.b16 %v45
    %v299 = vunpack.c.l.b16 %v46
    %v300 = vunpack.c.l.b16 %v47
    %v301 = vpack.c.b16 %v298, %v297
    %v302 = vpack.c.b16 %v300, %v299
    %305 = vmatpush.bf16.msra.mxu0 0
    %306 = vmatpush.bf16.msra.mxu0 0
    %307 = vmatpush.bf16.msra.mxu0 0
    %308 = vmatpush.bf16.msra.mxu0 0
    %309 = vmatpush.bf16.msra.mxu0 0
    %310 = vmatpush.bf16.msra.mxu0 0
    %311 = vmatpush.bf16.msra.mxu0 %v302
    %312 = vmatpush.bf16.msra.mxu0 %v301
    %313 = vmatmul.bf16.gmra.mxu0 %v152
    %v314 = vpop.f32.mrf.mxu0
    %v315 = vadd.f32 0.0, %v314
    %v316 = vpop.f32.mrf.mxu0
    %317 = vdwg.mxu0
    %v318 = vadd.f32 %v290, %v315
    %v319 = vxor.u32 %v318, 2147483648
    %v320 = vmul.f32 %v319, 1.442695
    %v321 = vpow.pop %v320
    %v322 = vadd.f32 %v321, 1.0
    %v323 = vrcp.pop %v322
    %v324 = vmul.f32 %v322, %v323
    %v325 = vsub.f32 1.0, %v324
    %v326 = vmul.f32 %v323, %v325
    %v327 = vadd.f32 %v323, %v326
    %vm328 = vweird.f32 %v322
    %vm329 = vweird.f32 %v323
    %vm330 = vmor %vm328, %vm329
    %v331 = vsel %vm330, %v323, %v327
    %v332 = vand.u32 2147483647, %v322
    %vm333 = vcmp.eq.f32.partialorder %v332, 8.507059e+37
    %v334 = vand.u32 %v322, 2147483648
    %v335 = vor.u32 1.1754944e-38, %v334
    %v336 = vsel %vm333, %v335, %v331
    %v337 = vmul.f32 1.0, %v336
    %v338 = vtanh.pop %v318
    %v339 = vmul.f32 %v337, 0.0
    %341 = vrot.lane.b32.xlu0 %v338, 64
    %v342 = vpop.permute.xlu0 %341
    %v344 = vmul.f32 %v337, %v342
    %346 = vrot.lane.b32.xlu0 %v344, 32
    %v347 = vpop.permute.xlu0 %346
    %v349 = vadd.f32 %v339, %v347
    %v350 = vtanh.pop %v349
    %352 = vrot.lane.b32.xlu0 %v350, 64
    %v353 = vpop.permute.xlu0 %352
    %v355 = vmul.f32 %v337, %v353
    %s356 = scalar_lea.vmem [#allocation2], 16
    %v357 = vld [vmem:[%s356] sm:$0xff]
    %v358 = vpack.c.bf16 %v264, %v264
    %360 = vrot.lane.b32.xlu0 %v358, 32
    %v361 = vpop.permute.xlu0 %360
    %v363 = vsel %vm150, %v361, 0
    %365 = vmatpush.bf16.msra.mxu0 0
    %366 = vmatpush.bf16.msra.mxu0 0
    %367 = vmatpush.bf16.msra.mxu0 0
    %368 = vmatpush.bf16.msra.mxu0 0
    %369 = vmatpush.bf16.msra.mxu0 0
    %370 = vmatpush.bf16.msra.mxu0 0
    %371 = vmatpush.bf16.msra.mxu0 %v147
    %372 = vmatpush.bf16.msra.mxu0 %v146
    %373 = vmatmul.bf16.gmra.mxu0 %v363
    %v374 = vpop.f32.mrf.mxu0
    %v375 = vadd.f32 0.0, %v374
    %v376 = vpop.f32.mrf.mxu0
    %377 = vdwg.mxu0
    %v378 = vadd.f32 %v357, %v375
    %v379 = vxor.u32 %v378, 2147483648
    %v380 = vmul.f32 %v379, 1.442695
    %v381 = vpow.pop %v380
    %v382 = vadd.f32 %v381, 1.0
    %v383 = vrcp.pop %v382
    %v384 = vmul.f32 %v382, %v383
    %v385 = vsub.f32 1.0, %v384
    %v386 = vmul.f32 %v383, %v385
    %v387 = vadd.f32 %v383, %v386
    %vm388 = vweird.f32 %v382
    %vm389 = vweird.f32 %v383
    %vm390 = vmor %vm388, %vm389
    %v391 = vsel %vm390, %v383, %v387
    %v392 = vand.u32 2147483647, %v382
    %vm393 = vcmp.eq.f32.partialorder %v392, 8.507059e+37
    %v394 = vand.u32 %v382, 2147483648
    %v395 = vor.u32 1.1754944e-38, %v394
    %v396 = vsel %vm393, %v395, %v391
    %v397 = vmul.f32 1.0, %v396
    %v398 = vtanh.pop %v378
    %v399 = vmul.f32 %v397, %v258
    %401 = vrot.lane.b32.xlu0 %v398, 64
    %v402 = vpop.permute.xlu0 %401
    %v404 = vmul.f32 %v397, %v402
    %406 = vrot.lane.b32.xlu0 %v404, 32
    %v407 = vpop.permute.xlu0 %406
    %v409 = vadd.f32 %v399, %v407
    %v410 = vtanh.pop %v409
    %412 = vrot.lane.b32.xlu0 %v410, 64
    %v413 = vpop.permute.xlu0 %412
    %v415 = vmul.f32 %v397, %v413
    %416 = vmatpush.bf16.msra.mxu0 0
    %417 = vmatpush.bf16.msra.mxu0 0
    %418 = vmatpush.bf16.msra.mxu0 0
    %419 = vmatpush.bf16.msra.mxu0 0
    %420 = vmatpush.bf16.msra.mxu0 0
    %421 = vmatpush.bf16.msra.mxu0 0
    %422 = vmatpush.bf16.msra.mxu0 %v277
    %423 = vmatpush.bf16.msra.mxu0 %v276
    %424 = vmatmul.bf16.gmra.mxu0 %v363
    %v425 = vpop.f32.mrf.mxu0
    %v426 = vadd.f32 %v266, %v425
    %v427 = vpop.f32.mrf.mxu0
    %428 = vdwg.mxu0
    %v429 = vpack.c.bf16 %v355, %v355
    %431 = vrot.lane.b32.xlu0 %v429, 32
    %v432 = vpop.permute.xlu0 %431
    %v434 = vsel %vm150, %v432, 0
    %436 = vmatpush.bf16.msra.mxu0 0
    %437 = vmatpush.bf16.msra.mxu0 0
    %438 = vmatpush.bf16.msra.mxu0 0
    %439 = vmatpush.bf16.msra.mxu0 0
    %440 = vmatpush.bf16.msra.mxu0 0
    %441 = vmatpush.bf16.msra.mxu0 0
    %442 = vmatpush.bf16.msra.mxu0 %v302
    %443 = vmatpush.bf16.msra.mxu0 %v301
    %444 = vmatmul.bf16.gmra.mxu0 %v434
    %v445 = vpop.f32.mrf.mxu0
    %v446 = vadd.f32 0.0, %v445
    %v447 = vpop.f32.mrf.mxu0
    %448 = vdwg.mxu0
    %v449 = vadd.f32 %v426, %v446
    %v450 = vxor.u32 %v449, 2147483648
    %v451 = vmul.f32 %v450, 1.442695
    %v452 = vpow.pop %v451
    %v453 = vadd.f32 %v452, 1.0
    %v454 = vrcp.pop %v453
    %v455 = vmul.f32 %v453, %v454
    %v456 = vsub.f32 1.0, %v455
    %v457 = vmul.f32 %v454, %v456
    %v458 = vadd.f32 %v454, %v457
    %vm459 = vweird.f32 %v453
    %vm460 = vweird.f32 %v454
    %vm461 = vmor %vm459, %vm460
    %v462 = vsel %vm461, %v454, %v458
    %v463 = vand.u32 2147483647, %v453
    %vm464 = vcmp.eq.f32.partialorder %v463, 8.507059e+37
    %v465 = vand.u32 %v453, 2147483648
    %v466 = vor.u32 1.1754944e-38, %v465
    %v467 = vsel %vm464, %v466, %v462
    %v468 = vmul.f32 1.0, %v467
    %v469 = vtanh.pop %v449
    %v470 = vmul.f32 %v468, %v349
    %472 = vrot.lane.b32.xlu0 %v469, 64
    %v473 = vpop.permute.xlu0 %472
    %v475 = vmul.f32 %v468, %v473
    %477 = vrot.lane.b32.xlu0 %v475, 32
    %v478 = vpop.permute.xlu0 %477
    %v480 = vadd.f32 %v470, %v478
    %v481 = vtanh.pop %v480
    %483 = vrot.lane.b32.xlu0 %v481, 64
    %v484 = vpop.permute.xlu0 %483
    %v486 = vmul.f32 %v468, %v484
    %s487 = scalar_lea.vmem [#allocation2], 24
    %v488 = vld [vmem:[%s487] sm:$0xff]
    %v489 = vpack.c.bf16 %v415, %v415
    %491 = vrot.lane.b32.xlu0 %v489, 32
    %v492 = vpop.permute.xlu0 %491
    %v494 = vsel %vm150, %v492, 0
    %496 = vmatpush.bf16.msra.mxu0 0
    %497 = vmatpush.bf16.msra.mxu0 0
    %498 = vmatpush.bf16.msra.mxu0 0
    %499 = vmatpush.bf16.msra.mxu0 0
    %500 = vmatpush.bf16.msra.mxu0 0
    %501 = vmatpush.bf16.msra.mxu0 0
    %502 = vmatpush.bf16.msra.mxu0 %v147
    %503 = vmatpush.bf16.msra.mxu0 %v146
    %504 = vmatmul.bf16.gmra.mxu0 %v494
    %v505 = vpop.f32.mrf.mxu0
    %v506 = vadd.f32 0.0, %v505
    %v507 = vpop.f32.mrf.mxu0
    %508 = vdwg.mxu0
    %v509 = vadd.f32 %v488, %v506
    %v510 = vxor.u32 %v509, 2147483648
    %v511 = vmul.f32 %v510, 1.442695
    %v512 = vpow.pop %v511
    %v513 = vadd.f32 %v512, 1.0
    %v514 = vrcp.pop %v513
    %v515 = vmul.f32 %v513, %v514
    %v516 = vsub.f32 1.0, %v515
    %v517 = vmul.f32 %v514, %v516
    %v518 = vadd.f32 %v514, %v517
    %vm519 = vweird.f32 %v513
    %vm520 = vweird.f32 %v514
    %vm521 = vmor %vm519, %vm520
    %v522 = vsel %vm521, %v514, %v518
    %v523 = vand.u32 2147483647, %v513
    %vm524 = vcmp.eq.f32.partialorder %v523, 8.507059e+37
    %v525 = vand.u32 %v513, 2147483648
    %v526 = vor.u32 1.1754944e-38, %v525
    %v527 = vsel %vm524, %v526, %v522
    %v528 = vmul.f32 1.0, %v527
    %v529 = vtanh.pop %v509
    %v530 = vmul.f32 %v528, %v409
    %532 = vrot.lane.b32.xlu0 %v529, 64
    %v533 = vpop.permute.xlu0 %532
    %v535 = vmul.f32 %v528, %v533
    %537 = vrot.lane.b32.xlu0 %v535, 32
    %v538 = vpop.permute.xlu0 %537
    %v540 = vadd.f32 %v530, %v538
    %v541 = vtanh.pop %v540
    %543 = vrot.lane.b32.xlu0 %v541, 64
    %v544 = vpop.permute.xlu0 %543
    %v546 = vmul.f32 %v528, %v544
    %547 = vmatpush.bf16.msra.mxu0 0
    %548 = vmatpush.bf16.msra.mxu0 0
    %549 = vmatpush.bf16.msra.mxu0 0
    %550 = vmatpush.bf16.msra.mxu0 0
    %551 = vmatpush.bf16.msra.mxu0 0
    %552 = vmatpush.bf16.msra.mxu0 0
    %553 = vmatpush.bf16.msra.mxu0 %v277
    %554 = vmatpush.bf16.msra.mxu0 %v276
    %555 = vmatmul.bf16.gmra.mxu0 %v494
    %v556 = vpop.f32.mrf.mxu0
    %v557 = vadd.f32 %v266, %v556
    %v558 = vpop.f32.mrf.mxu0
    %559 = vdwg.mxu0
    %v560 = vpack.c.bf16 %v486, %v486
    %562 = vrot.lane.b32.xlu0 %v560, 32
    %v563 = vpop.permute.xlu0 %562
    %v565 = vsel %vm150, %v563, 0
    %567 = vmatpush.bf16.msra.mxu0 0
    %568 = vmatpush.bf16.msra.mxu0 0
    %569 = vmatpush.bf16.msra.mxu0 0
    %570 = vmatpush.bf16.msra.mxu0 0
    %571 = vmatpush.bf16.msra.mxu0 0
    %572 = vmatpush.bf16.msra.mxu0 0
    %573 = vmatpush.bf16.msra.mxu0 %v302
    %574 = vmatpush.bf16.msra.mxu0 %v301
    %575 = vmatmul.bf16.gmra.mxu0 %v565
    %v576 = vpop.f32.mrf.mxu0
    %v577 = vadd.f32 0.0, %v576
    %v578 = vpop.f32.mrf.mxu0
    %579 = vdwg.mxu0
    %v580 = vadd.f32 %v557, %v577
    %v581 = vxor.u32 %v580, 2147483648
    %v582 = vmul.f32 %v581, 1.442695
    %v583 = vpow.pop %v582
    %v584 = vadd.f32 %v583, 1.0
    %v585 = vrcp.pop %v584
    %v586 = vmul.f32 %v584, %v585
    %v587 = vsub.f32 1.0, %v586
    %v588 = vmul.f32 %v585, %v587
    %v589 = vadd.f32 %v585, %v588
    %vm590 = vweird.f32 %v584
    %vm591 = vweird.f32 %v585
    %vm592 = vmor %vm590, %vm591
    %v593 = vsel %vm592, %v585, %v589
    %v594 = vand.u32 2147483647, %v584
    %vm595 = vcmp.eq.f32.partialorder %v594, 8.507059e+37
    %v596 = vand.u32 %v584, 2147483648
    %v597 = vor.u32 1.1754944e-38, %v596
    %v598 = vsel %vm595, %v597, %v593
    %v599 = vmul.f32 1.0, %v598
    %v600 = vtanh.pop %v580
    %v601 = vmul.f32 %v599, %v480
    %603 = vrot.lane.b32.xlu0 %v600, 64
    %v604 = vpop.permute.xlu0 %603
    %v606 = vmul.f32 %v599, %v604
    %608 = vrot.lane.b32.xlu0 %v606, 32
    %v609 = vpop.permute.xlu0 %608
    %v611 = vadd.f32 %v601, %v609
    %v612 = vtanh.pop %v611
    %614 = vrot.lane.b32.xlu0 %v612, 64
    %v615 = vpop.permute.xlu0 %614
    %v617 = vmul.f32 %v599, %v615
    %s618 = scalar_lea.vmem [#allocation2], 32
    %v619 = vld [vmem:[%s618] sm:$0xff]
    %v620 = vpack.c.bf16 %v546, %v546
    %622 = vrot.lane.b32.xlu0 %v620, 32
    %v623 = vpop.permute.xlu0 %622
    %v625 = vsel %vm150, %v623, 0
    %627 = vmatpush.bf16.msra.mxu0 0
    %628 = vmatpush.bf16.msra.mxu0 0
    %629 = vmatpush.bf16.msra.mxu0 0
    %630 = vmatpush.bf16.msra.mxu0 0
    %631 = vmatpush.bf16.msra.mxu0 0
    %632 = vmatpush.bf16.msra.mxu0 0
    %633 = vmatpush.bf16.msra.mxu0 %v147
    %634 = vmatpush.bf16.msra.mxu0 %v146
    %635 = vmatmul.bf16.gmra.mxu0 %v625
    %v636 = vpop.f32.mrf.mxu0
    %v637 = vadd.f32 0.0, %v636
    %v638 = vpop.f32.mrf.mxu0
    %639 = vdwg.mxu0
    %v640 = vadd.f32 %v619, %v637
    %v641 = vxor.u32 %v640, 2147483648
    %v642 = vmul.f32 %v641, 1.442695
    %v643 = vpow.pop %v642
    %v644 = vadd.f32 %v643, 1.0
    %v645 = vrcp.pop %v644
    %v646 = vmul.f32 %v644, %v645
    %v647 = vsub.f32 1.0, %v646
    %v648 = vmul.f32 %v645, %v647
    %v649 = vadd.f32 %v645, %v648
    %vm650 = vweird.f32 %v644
    %vm651 = vweird.f32 %v645
    %vm652 = vmor %vm650, %vm651
    %v653 = vsel %vm652, %v645, %v649
    %v654 = vand.u32 2147483647, %v644
    %vm655 = vcmp.eq.f32.partialorder %v654, 8.507059e+37
    %v656 = vand.u32 %v644, 2147483648
    %v657 = vor.u32 1.1754944e-38, %v656
    %v658 = vsel %vm655, %v657, %v653
    %v659 = vmul.f32 1.0, %v658
    %v660 = vtanh.pop %v640
    %v661 = vmul.f32 %v659, %v540
    %663 = vrot.lane.b32.xlu0 %v660, 64
    %v664 = vpop.permute.xlu0 %663
    %v666 = vmul.f32 %v659, %v664
    %668 = vrot.lane.b32.xlu0 %v666, 32
    %v669 = vpop.permute.xlu0 %668
    %v671 = vadd.f32 %v661, %v669
    %v672 = vtanh.pop %v671
    %674 = vrot.lane.b32.xlu0 %v672, 64
    %v675 = vpop.permute.xlu0 %674
    %v677 = vmul.f32 %v659, %v675
    %678 = vmatpush.bf16.msra.mxu0 0
    %679 = vmatpush.bf16.msra.mxu0 0
    %680 = vmatpush.bf16.msra.mxu0 0
    %681 = vmatpush.bf16.msra.mxu0 0
    %682 = vmatpush.bf16.msra.mxu0 0
    %683 = vmatpush.bf16.msra.mxu0 0
    %684 = vmatpush.bf16.msra.mxu0 %v277
    %685 = vmatpush.bf16.msra.mxu0 %v276
    %686 = vmatmul.bf16.gmra.mxu0 %v625
    %v687 = vpop.f32.mrf.mxu0
    %v688 = vadd.f32 %v266, %v687
    %v689 = vpop.f32.mrf.mxu0
    %690 = vdwg.mxu0
    %v691 = vpack.c.bf16 %v617, %v617
    %693 = vrot.lane.b32.xlu0 %v691, 32
    %v694 = vpop.permute.xlu0 %693
    %v696 = vsel %vm150, %v694, 0
    %698 = vmatpush.bf16.msra.mxu0 0
    %699 = vmatpush.bf16.msra.mxu0 0
    %700 = vmatpush.bf16.msra.mxu0 0
    %701 = vmatpush.bf16.msra.mxu0 0
    %702 = vmatpush.bf16.msra.mxu0 0
    %703 = vmatpush.bf16.msra.mxu0 0
    %704 = vmatpush.bf16.msra.mxu0 %v302
    %705 = vmatpush.bf16.msra.mxu0 %v301
    %706 = vmatmul.bf16.gmra.mxu0 %v696
    %v707 = vpop.f32.mrf.mxu0
    %v708 = vadd.f32 0.0, %v707
    %v709 = vpop.f32.mrf.mxu0
    %710 = vdwg.mxu0
    %v711 = vadd.f32 %v688, %v708
    %v712 = vxor.u32 %v711, 2147483648
    %v713 = vmul.f32 %v712, 1.442695
    %v714 = vpow.pop %v713
    %v715 = vadd.f32 %v714, 1.0
    %v716 = vrcp.pop %v715
    %v717 = vmul.f32 %v715, %v716
    %v718 = vsub.f32 1.0, %v717
    %v719 = vmul.f32 %v716, %v718
    %v720 = vadd.f32 %v716, %v719
    %vm721 = vweird.f32 %v715
    %vm722 = vweird.f32 %v716
    %vm723 = vmor %vm721, %vm722
    %v724 = vsel %vm723, %v716, %v720
    %v725 = vand.u32 2147483647, %v715
    %vm726 = vcmp.eq.f32.partialorder %v725, 8.507059e+37
    %v727 = vand.u32 %v715, 2147483648
    %v728 = vor.u32 1.1754944e-38, %v727
    %v729 = vsel %vm726, %v728, %v724
    %v730 = vmul.f32 1.0, %v729
    %v731 = vtanh.pop %v711
    %v732 = vmul.f32 %v730, %v611
    %734 = vrot.lane.b32.xlu0 %v731, 64
    %v735 = vpop.permute.xlu0 %734
    %v737 = vmul.f32 %v730, %v735
    %739 = vrot.lane.b32.xlu0 %v737, 32
    %v740 = vpop.permute.xlu0 %739
    %v742 = vadd.f32 %v732, %v740
    %v743 = vtanh.pop %v742
    %745 = vrot.lane.b32.xlu0 %v743, 64
    %v746 = vpop.permute.xlu0 %745
    %v748 = vmul.f32 %v730, %v746
    %s749 = scalar_lea.vmem [#allocation2], 40
    %v750 = vld [vmem:[%s749] sm:$0xff]
    %v751 = vpack.c.bf16 %v677, %v677
    %753 = vrot.lane.b32.xlu0 %v751, 32
    %v754 = vpop.permute.xlu0 %753
    %v756 = vsel %vm150, %v754, 0
    %758 = vmatpush.bf16.msra.mxu0 0
    %759 = vmatpush.bf16.msra.mxu0 0
    %760 = vmatpush.bf16.msra.mxu0 0
    %761 = vmatpush.bf16.msra.mxu0 0
    %762 = vmatpush.bf16.msra.mxu0 0
    %763 = vmatpush.bf16.msra.mxu0 0
    %764 = vmatpush.bf16.msra.mxu0 %v147
    %765 = vmatpush.bf16.msra.mxu0 %v146
    %766 = vmatmul.bf16.gmra.mxu0 %v756
    %v767 = vpop.f32.mrf.mxu0
    %v768 = vadd.f32 0.0, %v767
    %v769 = vpop.f32.mrf.mxu0
    %770 = vdwg.mxu0
    %v771 = vadd.f32 %v750, %v768
    %v772 = vxor.u32 %v771, 2147483648
    %v773 = vmul.f32 %v772, 1.442695
    %v774 = vpow.pop %v773
    %v775 = vadd.f32 %v774, 1.0
    %v776 = vrcp.pop %v775
    %v777 = vmul.f32 %v775, %v776
    %v778 = vsub.f32 1.0, %v777
    %v779 = vmul.f32 %v776, %v778
    %v780 = vadd.f32 %v776, %v779
    %vm781 = vweird.f32 %v775
    %vm782 = vweird.f32 %v776
    %vm783 = vmor %vm781, %vm782
    %v784 = vsel %vm783, %v776, %v780
    %v785 = vand.u32 2147483647, %v775
    %vm786 = vcmp.eq.f32.partialorder %v785, 8.507059e+37
    %v787 = vand.u32 %v775, 2147483648
    %v788 = vor.u32 1.1754944e-38, %v787
    %v789 = vsel %vm786, %v788, %v784
    %v790 = vmul.f32 1.0, %v789
    %v791 = vtanh.pop %v771
    %v792 = vmul.f32 %v790, %v671
    %794 = vrot.lane.b32.xlu0 %v791, 64
    %v795 = vpop.permute.xlu0 %794
    %v797 = vmul.f32 %v790, %v795
    %799 = vrot.lane.b32.xlu0 %v797, 32
    %v800 = vpop.permute.xlu0 %799
    %v802 = vadd.f32 %v792, %v800
    %v803 = vtanh.pop %v802
    %805 = vrot.lane.b32.xlu0 %v803, 64
    %v806 = vpop.permute.xlu0 %805
    %v808 = vmul.f32 %v790, %v806
    %809 = vmatpush.bf16.msra.mxu0 0
    %810 = vmatpush.bf16.msra.mxu0 0
    %811 = vmatpush.bf16.msra.mxu0 0
    %812 = vmatpush.bf16.msra.mxu0 0
    %813 = vmatpush.bf16.msra.mxu0 0
    %814 = vmatpush.bf16.msra.mxu0 0
    %815 = vmatpush.bf16.msra.mxu0 %v277
    %816 = vmatpush.bf16.msra.mxu0 %v276
    %817 = vmatmul.bf16.gmra.mxu0 %v756
    %v818 = vpop.f32.mrf.mxu0
    %v819 = vadd.f32 %v266, %v818
    %v820 = vpop.f32.mrf.mxu0
    %821 = vdwg.mxu0
    %v822 = vpack.c.bf16 %v748, %v748
    %824 = vrot.lane.b32.xlu0 %v822, 32
    %v825 = vpop.permute.xlu0 %824
    %v827 = vsel %vm150, %v825, 0
    %829 = vmatpush.bf16.msra.mxu0 0
    %830 = vmatpush.bf16.msra.mxu0 0
    %831 = vmatpush.bf16.msra.mxu0 0
    %832 = vmatpush.bf16.msra.mxu0 0
    %833 = vmatpush.bf16.msra.mxu0 0
    %834 = vmatpush.bf16.msra.mxu0 0
    %835 = vmatpush.bf16.msra.mxu0 %v302
    %836 = vmatpush.bf16.msra.mxu0 %v301
    %837 = vmatmul.bf16.gmra.mxu0 %v827
    %v838 = vpop.f32.mrf.mxu0
    %v839 = vadd.f32 0.0, %v838
    %v840 = vpop.f32.mrf.mxu0
    %841 = vdwg.mxu0
    %v842 = vadd.f32 %v819, %v839
    %v843 = vxor.u32 %v842, 2147483648
    %v844 = vmul.f32 %v843, 1.442695
    %v845 = vpow.pop %v844
    %v846 = vadd.f32 %v845, 1.0
    %v847 = vrcp.pop %v846
    %v848 = vmul.f32 %v846, %v847
    %v849 = vsub.f32 1.0, %v848
    %v850 = vmul.f32 %v847, %v849
    %v851 = vadd.f32 %v847, %v850
    %vm852 = vweird.f32 %v846
    %vm853 = vweird.f32 %v847
    %vm854 = vmor %vm852, %vm853
    %v855 = vsel %vm854, %v847, %v851
    %v856 = vand.u32 2147483647, %v846
    %vm857 = vcmp.eq.f32.partialorder %v856, 8.507059e+37
    %v858 = vand.u32 %v846, 2147483648
    %v859 = vor.u32 1.1754944e-38, %v858
    %v860 = vsel %vm857, %v859, %v855
    %v861 = vmul.f32 1.0, %v860
    %v862 = vtanh.pop %v842
    %v863 = vmul.f32 %v861, %v742
    %865 = vrot.lane.b32.xlu0 %v862, 64
    %v866 = vpop.permute.xlu0 %865
    %v868 = vmul.f32 %v861, %v866
    %870 = vrot.lane.b32.xlu0 %v868, 32
    %v871 = vpop.permute.xlu0 %870
    %v873 = vadd.f32 %v863, %v871
    %v874 = vtanh.pop %v873
    %876 = vrot.lane.b32.xlu0 %v874, 64
    %v877 = vpop.permute.xlu0 %876
    %v879 = vmul.f32 %v861, %v877
    %s880 = scalar_lea.vmem [#allocation2], 48
    %v881 = vld [vmem:[%s880] sm:$0xff]
    %v882 = vpack.c.bf16 %v808, %v808
    %884 = vrot.lane.b32.xlu0 %v882, 32
    %v885 = vpop.permute.xlu0 %884
    %v887 = vsel %vm150, %v885, 0
    %889 = vmatpush.bf16.msra.mxu0 0
    %890 = vmatpush.bf16.msra.mxu0 0
    %891 = vmatpush.bf16.msra.mxu0 0
    %892 = vmatpush.bf16.msra.mxu0 0
    %893 = vmatpush.bf16.msra.mxu0 0
    %894 = vmatpush.bf16.msra.mxu0 0
    %895 = vmatpush.bf16.msra.mxu0 %v147
    %896 = vmatpush.bf16.msra.mxu0 %v146
    %897 = vmatmul.bf16.gmra.mxu0 %v887
    %v898 = vpop.f32.mrf.mxu0
    %v899 = vadd.f32 0.0, %v898
    %v900 = vpop.f32.mrf.mxu0
    %901 = vdwg.mxu0
    %v902 = vadd.f32 %v881, %v899
    %v903 = vxor.u32 %v902, 2147483648
    %v904 = vmul.f32 %v903, 1.442695
    %v905 = vpow.pop %v904
    %v906 = vadd.f32 %v905, 1.0
    %v907 = vrcp.pop %v906
    %v908 = vmul.f32 %v906, %v907
    %v909 = vsub.f32 1.0, %v908
    %v910 = vmul.f32 %v907, %v909
    %v911 = vadd.f32 %v907, %v910
    %vm912 = vweird.f32 %v906
    %vm913 = vweird.f32 %v907
    %vm914 = vmor %vm912, %vm913
    %v915 = vsel %vm914, %v907, %v911
    %v916 = vand.u32 2147483647, %v906
    %vm917 = vcmp.eq.f32.partialorder %v916, 8.507059e+37
    %v918 = vand.u32 %v906, 2147483648
    %v919 = vor.u32 1.1754944e-38, %v918
    %v920 = vsel %vm917, %v919, %v915
    %v921 = vmul.f32 1.0, %v920
    %v922 = vtanh.pop %v902
    %v923 = vmul.f32 %v921, %v802
    %925 = vrot.lane.b32.xlu0 %v922, 64
    %v926 = vpop.permute.xlu0 %925
    %v928 = vmul.f32 %v921, %v926
    %930 = vrot.lane.b32.xlu0 %v928, 32
    %v931 = vpop.permute.xlu0 %930
    %v933 = vadd.f32 %v923, %v931
    %v934 = vtanh.pop %v933
    %936 = vrot.lane.b32.xlu0 %v934, 64
    %v937 = vpop.permute.xlu0 %936
    %v939 = vmul.f32 %v921, %v937
    %940 = vmatpush.bf16.msra.mxu0 0
    %941 = vmatpush.bf16.msra.mxu0 0
    %942 = vmatpush.bf16.msra.mxu0 0
    %943 = vmatpush.bf16.msra.mxu0 0
    %944 = vmatpush.bf16.msra.mxu0 0
    %945 = vmatpush.bf16.msra.mxu0 0
    %946 = vmatpush.bf16.msra.mxu0 %v277
    %947 = vmatpush.bf16.msra.mxu0 %v276
    %948 = vmatmul.bf16.gmra.mxu0 %v887
    %v949 = vpop.f32.mrf.mxu0
    %v950 = vadd.f32 %v266, %v949
    %v951 = vpop.f32.mrf.mxu0
    %952 = vdwg.mxu0
    %v953 = vpack.c.bf16 %v879, %v879
    %955 = vrot.lane.b32.xlu0 %v953, 32
    %v956 = vpop.permute.xlu0 %955
    %v958 = vsel %vm150, %v956, 0
    %960 = vmatpush.bf16.msra.mxu0 0
    %961 = vmatpush.bf16.msra.mxu0 0
    %962 = vmatpush.bf16.msra.mxu0 0
    %963 = vmatpush.bf16.msra.mxu0 0
    %964 = vmatpush.bf16.msra.mxu0 0
    %965 = vmatpush.bf16.msra.mxu0 0
    %966 = vmatpush.bf16.msra.mxu0 %v302
    %967 = vmatpush.bf16.msra.mxu0 %v301
    %968 = vmatmul.bf16.gmra.mxu0 %v958
    %v969 = vpop.f32.mrf.mxu0
    %v970 = vadd.f32 0.0, %v969
    %v971 = vpop.f32.mrf.mxu0
    %972 = vdwg.mxu0
    %v973 = vadd.f32 %v950, %v970
    %v974 = vxor.u32 %v973, 2147483648
    %v975 = vmul.f32 %v974, 1.442695
    %v976 = vpow.pop %v975
    %v977 = vadd.f32 %v976, 1.0
    %v978 = vrcp.pop %v977
    %v979 = vmul.f32 %v977, %v978
    %v980 = vsub.f32 1.0, %v979
    %v981 = vmul.f32 %v978, %v980
    %v982 = vadd.f32 %v978, %v981
    %vm983 = vweird.f32 %v977
    %vm984 = vweird.f32 %v978
    %vm985 = vmor %vm983, %vm984
    %v986 = vsel %vm985, %v978, %v982
    %v987 = vand.u32 2147483647, %v977
    %vm988 = vcmp.eq.f32.partialorder %v987, 8.507059e+37
    %v989 = vand.u32 %v977, 2147483648
    %v990 = vor.u32 1.1754944e-38, %v989
    %v991 = vsel %vm988, %v990, %v986
    %v992 = vmul.f32 1.0, %v991
    %v993 = vtanh.pop %v973
    %v994 = vmul.f32 %v992, %v873
    %996 = vrot.lane.b32.xlu0 %v993, 64
    %v997 = vpop.permute.xlu0 %996
    %v999 = vmul.f32 %v992, %v997
    %1001 = vrot.lane.b32.xlu0 %v999, 32
    %v1002 = vpop.permute.xlu0 %1001
    %v1004 = vadd.f32 %v994, %v1002
    %v1005 = vtanh.pop %v1004
    %1007 = vrot.lane.b32.xlu0 %v1005, 64
    %v1008 = vpop.permute.xlu0 %1007
    %v1010 = vmul.f32 %v992, %v1008
    %s1011 = scalar_lea.vmem [#allocation2], 56
    %v1012 = vld [vmem:[%s1011] sm:$0xff]
    %v1013 = vpack.c.bf16 %v939, %v939
    %1015 = vrot.lane.b32.xlu0 %v1013, 32
    %v1016 = vpop.permute.xlu0 %1015
    %v1018 = vsel %vm150, %v1016, 0
    %1020 = vmatpush.bf16.msra.mxu0 0
    %1021 = vmatpush.bf16.msra.mxu0 0
    %1022 = vmatpush.bf16.msra.mxu0 0
    %1023 = vmatpush.bf16.msra.mxu0 0
    %1024 = vmatpush.bf16.msra.mxu0 0
    %1025 = vmatpush.bf16.msra.mxu0 0
    %1026 = vmatpush.bf16.msra.mxu0 %v147
    %1027 = vmatpush.bf16.msra.mxu0 %v146
    %1028 = vmatmul.bf16.gmra.mxu0 %v1018
    %v1029 = vpop.f32.mrf.mxu0
    %v1030 = vadd.f32 0.0, %v1029
    %v1031 = vpop.f32.mrf.mxu0
    %1032 = vdwg.mxu0
    %v1033 = vadd.f32 %v1012, %v1030
    %v1034 = vxor.u32 %v1033, 2147483648
    %v1035 = vmul.f32 %v1034, 1.442695
    %v1036 = vpow.pop %v1035
    %v1037 = vadd.f32 %v1036, 1.0
    %v1038 = vrcp.pop %v1037
    %v1039 = vmul.f32 %v1037, %v1038
    %v1040 = vsub.f32 1.0, %v1039
    %v1041 = vmul.f32 %v1038, %v1040
    %v1042 = vadd.f32 %v1038, %v1041
    %vm1043 = vweird.f32 %v1037
    %vm1044 = vweird.f32 %v1038
    %vm1045 = vmor %vm1043, %vm1044
    %v1046 = vsel %vm1045, %v1038, %v1042
    %v1047 = vand.u32 2147483647, %v1037
    %vm1048 = vcmp.eq.f32.partialorder %v1047, 8.507059e+37
    %v1049 = vand.u32 %v1037, 2147483648
    %v1050 = vor.u32 1.1754944e-38, %v1049
    %v1051 = vsel %vm1048, %v1050, %v1046
    %v1052 = vmul.f32 1.0, %v1051
    %v1053 = vtanh.pop %v1033
    %v1054 = vmul.f32 %v1052, %v933
    %1056 = vrot.lane.b32.xlu0 %v1053, 64
    %v1057 = vpop.permute.xlu0 %1056
    %v1059 = vmul.f32 %v1052, %v1057
    %1061 = vrot.lane.b32.xlu0 %v1059, 32
    %v1062 = vpop.permute.xlu0 %1061
    %v1064 = vadd.f32 %v1054, %v1062
    %v1065 = vtanh.pop %v1064
    %1067 = vrot.lane.b32.xlu0 %v1065, 64
    %v1068 = vpop.permute.xlu0 %1067
    %v1070 = vmul.f32 %v1052, %v1068
    %1071 = vmatpush.bf16.msra.mxu0 0
    %1072 = vmatpush.bf16.msra.mxu0 0
    %1073 = vmatpush.bf16.msra.mxu0 0
    %1074 = vmatpush.bf16.msra.mxu0 0
    %1075 = vmatpush.bf16.msra.mxu0 0
    %1076 = vmatpush.bf16.msra.mxu0 0
    %1077 = vmatpush.bf16.msra.mxu0 %v277
    %1078 = vmatpush.bf16.msra.mxu0 %v276
    %1079 = vmatmul.bf16.gmra.mxu0 %v1018
    %v1080 = vpop.f32.mrf.mxu0
    %v1081 = vadd.f32 %v266, %v1080
    %v1082 = vpop.f32.mrf.mxu0
    %1083 = vdwg.mxu0
    %v1084 = vpack.c.bf16 %v1010, %v1010
    %1086 = vrot.lane.b32.xlu0 %v1084, 32
    %v1087 = vpop.permute.xlu0 %1086
    %v1089 = vsel %vm150, %v1087, 0
    %1091 = vmatpush.bf16.msra.mxu0 0
    %1092 = vmatpush.bf16.msra.mxu0 0
    %1093 = vmatpush.bf16.msra.mxu0 0
    %1094 = vmatpush.bf16.msra.mxu0 0
    %1095 = vmatpush.bf16.msra.mxu0 0
    %1096 = vmatpush.bf16.msra.mxu0 0
    %1097 = vmatpush.bf16.msra.mxu0 %v302
    %1098 = vmatpush.bf16.msra.mxu0 %v301
    %1099 = vmatmul.bf16.gmra.mxu0 %v1089
    %v1100 = vpop.f32.mrf.mxu0
    %v1101 = vadd.f32 0.0, %v1100
    %v1102 = vpop.f32.mrf.mxu0
    %1103 = vdwg.mxu0
    %v1104 = vadd.f32 %v1081, %v1101
    %v1105 = vxor.u32 %v1104, 2147483648
    %v1106 = vmul.f32 %v1105, 1.442695
    %v1107 = vpow.pop %v1106
    %v1108 = vadd.f32 %v1107, 1.0
    %v1109 = vrcp.pop %v1108
    %v1110 = vmul.f32 %v1108, %v1109
    %v1111 = vsub.f32 1.0, %v1110
    %v1112 = vmul.f32 %v1109, %v1111
    %v1113 = vadd.f32 %v1109, %v1112
    %vm1114 = vweird.f32 %v1108
    %vm1115 = vweird.f32 %v1109
    %vm1116 = vmor %vm1114, %vm1115
    %v1117 = vsel %vm1116, %v1109, %v1113
    %v1118 = vand.u32 2147483647, %v1108
    %vm1119 = vcmp.eq.f32.partialorder %v1118, 8.507059e+37
    %v1120 = vand.u32 %v1108, 2147483648
    %v1121 = vor.u32 1.1754944e-38, %v1120
    %v1122 = vsel %vm1119, %v1121, %v1117
    %v1123 = vmul.f32 1.0, %v1122
    %v1124 = vtanh.pop %v1104
    %v1125 = vmul.f32 %v1123, %v1004
    %1127 = vrot.lane.b32.xlu0 %v1124, 64
    %v1128 = vpop.permute.xlu0 %1127
    %v1130 = vmul.f32 %v1123, %v1128
    %1132 = vrot.lane.b32.xlu0 %v1130, 32
    %v1133 = vpop.permute.xlu0 %1132
    %v1135 = vadd.f32 %v1125, %v1133
    %v1136 = vtanh.pop %v1135
    %1138 = vrot.lane.b32.xlu0 %v1136, 64
    %v1139 = vpop.permute.xlu0 %1138
    %v1141 = vmul.f32 %v1123, %v1139
    %v1142 = vpack.c.bf16 %v1070, %v1070
    %1144 = vrot.lane.b32.xlu0 %v1142, 32
    %v1145 = vpop.permute.xlu0 %1144
    %v1147 = vsel %vm150, %v1145, 0
    %1149 = vmatpush.bf16.msra.mxu0 0
    %1150 = vmatpush.bf16.msra.mxu0 0
    %1151 = vmatpush.bf16.msra.mxu0 0
    %1152 = vmatpush.bf16.msra.mxu0 0
    %1153 = vmatpush.bf16.msra.mxu0 0
    %1154 = vmatpush.bf16.msra.mxu0 0
    %1155 = vmatpush.bf16.msra.mxu0 %v277
    %1156 = vmatpush.bf16.msra.mxu0 %v276
    %1157 = vmatmul.bf16.gmra.mxu0 %v1147
    %v1158 = vpop.f32.mrf.mxu0
    %v1159 = vadd.f32 %v266, %v1158
    %v1160 = vpop.f32.mrf.mxu0
    %1161 = vdwg.mxu0
    %v1162 = vpack.c.bf16 %v1141, %v1141
    %1164 = vrot.lane.b32.xlu0 %v1162, 32
    %v1165 = vpop.permute.xlu0 %1164
    %v1167 = vsel %vm150, %v1165, 0
    %1169 = vmatpush.bf16.msra.mxu0 0
    %1170 = vmatpush.bf16.msra.mxu0 0
    %1171 = vmatpush.bf16.msra.mxu0 0
    %1172 = vmatpush.bf16.msra.mxu0 0
    %1173 = vmatpush.bf16.msra.mxu0 0
    %1174 = vmatpush.bf16.msra.mxu0 0
    %1175 = vmatpush.bf16.msra.mxu0 %v302
    %1176 = vmatpush.bf16.msra.mxu0 %v301
    %1177 = vmatmul.bf16.gmra.mxu0 %v1167
    %v1178 = vpop.f32.mrf.mxu0
    %v1179 = vadd.f32 0.0, %v1178
    %v1180 = vpop.f32.mrf.mxu0
    %1181 = vdwg.mxu0
    %v1182 = vadd.f32 %v1159, %v1179
    %v1183 = vxor.u32 %v1182, 2147483648
    %v1184 = vmul.f32 %v1183, 1.442695
    %v1185 = vpow.pop %v1184
    %v1186 = vadd.f32 %v1185, 1.0
    %v1187 = vrcp.pop %v1186
    %v1188 = vmul.f32 %v1186, %v1187
    %v1189 = vsub.f32 1.0, %v1188
    %v1190 = vmul.f32 %v1187, %v1189
    %v1191 = vadd.f32 %v1187, %v1190
    %vm1192 = vweird.f32 %v1186
    %vm1193 = vweird.f32 %v1187
    %vm1194 = vmor %vm1192, %vm1193
    %v1195 = vsel %vm1194, %v1187, %v1191
    %v1196 = vand.u32 2147483647, %v1186
    %vm1197 = vcmp.eq.f32.partialorder %v1196, 8.507059e+37
    %v1198 = vand.u32 %v1186, 2147483648
    %v1199 = vor.u32 1.1754944e-38, %v1198
    %v1200 = vsel %vm1197, %v1199, %v1195
    %v1201 = vmul.f32 1.0, %v1200
    %v1202 = vtanh.pop %v1182
    %v1203 = vmul.f32 %v1201, %v1135
    %1205 = vrot.lane.b32.xlu0 %v1202, 64
    %v1206 = vpop.permute.xlu0 %1205
    %v1208 = vmul.f32 %v1201, %v1206
    %1210 = vrot.lane.b32.xlu0 %v1208, 32
    %v1211 = vpop.permute.xlu0 %1210
    %v1213 = vadd.f32 %v1203, %v1211
    %v1214 = vtanh.pop %v1213
    %1216 = vrot.lane.b32.xlu0 %v1214, 64
    %v1217 = vpop.permute.xlu0 %1216
    %v1219 = vmul.f32 %v1201, %v1217
    %v1220 = vld [vmem:[%s7] sm:$0xf]
    %v1221 = vld [vmem:[%s7 + $0x4] sm:$0xf]
    %v1222 = vld [vmem:[%s7 + $0x8] sm:$0xf]
    %v1223 = vld [vmem:[%s7 + $0xc] sm:$0xf]
    %v1224 = vpack.c.bf16 %v1219, %v1219
    %v1225 = vld [vmem:[%s8] sm:$0x1]
    %v1227 = vperm.slane %v1225, 0
    %1230 = vrot.lane.b32.xlu0 %v1224, 32
    %v1231 = vpop.permute.xlu0 %1230
    %v1236 = vunpack.c.l.b16 %v1220
    %v1237 = vunpack.c.l.b16 %v1221
    %v1238 = vunpack.c.l.b16 %v1222
    %v1239 = vunpack.c.l.b16 %v1223
    %v1240 = vpack.c.b16 %v1237, %v1236
    %v1241 = vpack.c.b16 %v1239, %v1238
    %v1245 = vsel %vm150, %v1231, 0
    %1247 = vmatpush.bf16.msra.mxu0 0
    %1248 = vmatpush.bf16.msra.mxu0 0
    %1249 = vmatpush.bf16.msra.mxu0 0
    %1250 = vmatpush.bf16.msra.mxu0 0
    %1251 = vmatpush.bf16.msra.mxu0 0
    %1252 = vmatpush.bf16.msra.mxu0 0
    %1253 = vmatpush.bf16.msra.mxu0 %v1241
    %1254 = vmatpush.bf16.msra.mxu0 %v1240
    %1255 = vmatmul.bf16.gmra.mxu0 %v1245
    %v1256 = vpop.f32.mrf.mxu0
    %v1257 = vadd.f32 %v1227, %v1256
    %v1258 = vpop.f32.mrf.mxu0
    %1259 = vdwg.mxu0
    %vm1260 = vcmask 64512
    %1261 = vst.msk [vmem:[#allocation3] sm:$0xff] %vm1260, %v1257
    // Predicated region
    $region38: #{lstm_model_forward.1} parent=1 // pred_check
      _
    $region39: #{lstm_model_forward.1} parent=1 // pred_check_branch
      %1263 = sbr.rel (0) target = $region41
    $region40: #{lstm_model_forward.1} parent=1 // pred_region
      %1265 = vsyncadd [#allocation4], 0
      %s1267 = sshll.u32 [#allocation3], 4
      %s1268 = int_to_ptr.vmem [resolvable:$true] %s1267
      %s1269 = sshll.u32 %s9, 4
      %s1270 = int_to_ptr.hbm [resolvable:$true] %s1269
      %1272 = dma.vmem_to_hbm [thread:$0]  %s1268, 128, %s1270, [#allocation4]
    $region41: #{lstm_model_forward.1} parent=1 // pred_fallthru
      _
    // Predicated region
    $region42: #{lstm_model_forward.1} parent=1 // pred_check
      _
    $region43: #{lstm_model_forward.1} parent=1 // pred_check_branch
      %1274 = sbr.rel (0) target = $region45
    $region44: #{lstm_model_forward.1} parent=1 // pred_region
      %1276 = dma.done [#allocation4], 128
    $region45: #{lstm_model_forward.1} parent=1 // pred_fallthru
      _
    %1277 = vsyncpa [#allocation4], 1

</llo_original>
